<compile_context>
chip_gen: v5e
topology: v5e:2x2
jax: 0.10.0
libtpu: 0.0.40
codegen_flags: <defaults>
</compile_context>

<pallas_src>
import functools

import jax
import jax.numpy as jnp
from jax import lax
from jax.experimental import pallas as pl
from jax.experimental.pallas import tpu as pltpu

BN_EPS = 1e-5
CP = 128                        # lane-dense channel padding for VMEM compute
COMPUTE_DTYPE = jnp.bfloat16    # MXU operand dtype; f32 accumulate + epilogue


def _round_up(x, m):
    return (x + m - 1) // m * m


def _rows(i, tm):
    """Dynamic (or static) row window of `tm` rows starting at i*tm."""
    start = i * tm
    if not isinstance(start, int):
        start = pl.multiple_of(start, 8)      # tm is always a multiple of 8
    return pl.ds(start, tm)


def _scale_shift(ssum, ssq, gamma, beta, inv_m):
    """Per-channel BN affine from accumulated sum / sum-of-squares."""
    mean = ssum * inv_m                                   # (1, CP)
    var = jnp.maximum(ssq * inv_m - mean * mean, 0.0)     # clamp cancellation
    inv = lax.rsqrt(var + BN_EPS)                         # EUP
    scale = gamma * inv
    shift = beta - mean * scale
    return scale, shift


def fused_track_kernel(x_ref, w0_ref, w_ref, gamma_ref, beta_ref,
                       out_ref, y_ref,
                       *, m_true, tm, n_tiles, n_layers, c0, cout):
    """One full encoder track (all layers) with the activation VMEM-resident.

    x_ref:     (Mp, c0)  f32   one track's input rows (channels-last)
    w0_ref:    (c0, CP)  f32   layer-0 1x1-conv weight (lane padded)
    w_ref:     (L-1, CP, CP) bf16   layers 1..L-1 weights (padded)
    gamma_ref: (L, CP)   f32   BN gammas (padded lanes are 0)
    beta_ref:  (L, CP)   f32   BN betas  (padded lanes are 0)
    out_ref:   (Mp, cout) f32  final activations (valid channels only)
    y_ref:     (Mp, CP)  f32   VMEM slab holding the current layer's pre-BN y
    """
    inv_m = 1.0 / float(m_true)
    zeros = jnp.zeros((1, CP), jnp.float32)

    # Row mask for the (possibly partial) last tile only.
    last_valid = m_true - (n_tiles - 1) * tm
    row_mask = (lax.broadcasted_iota(jnp.int32, (tm, 1), 0)
                < last_valid).astype(jnp.float32)

    # ---- layer 0: cin is tiny -> VPU broadcast MAC (no MXU, no lane padding
    # of the input).  Padded input rows are zero, so no stats mask is needed.
    w0 = w0_ref[...]                                      # (c0, CP)

    def l0_tile(i, carry):
        ssum, ssq = carry
        rows = _rows(i, tm)
        x = x_ref[rows, :]                                # (tm, c0) f32
        y = x[:, 0:1] * w0[0:1, :]
        for k in range(1, c0):
            y = y + x[:, k:k + 1] * w0[k:k + 1, :]
        y_ref[rows, :] = y
        return (ssum + jnp.sum(y, axis=0, keepdims=True),
                ssq + jnp.sum(y * y, axis=0, keepdims=True))

    ssum, ssq = lax.fori_loop(0, n_tiles, l0_tile, (zeros, zeros))
    scale, shift = _scale_shift(ssum, ssq, gamma_ref[pl.ds(0, 1), :],
                                beta_ref[pl.ds(0, 1), :], inv_m)

    # ---- layers 1..L-1: previous layer's BN+ReLU fused into this layer's
    # GEMM; in-place tile update of the VMEM slab; single-pass stats.
    for layer in range(1, n_layers):
        wl = w_ref[layer - 1]                             # (CP, CP) bf16

        def gemm_tile(i, carry, mask=None, scale=scale, shift=shift, wl=wl):
            ssum, ssq = carry
            rows = _rows(i, tm)
            a = jnp.maximum(y_ref[rows, :] * scale + shift, 0.0)
            if mask is not None:
                a = a * mask                              # zero padded rows
            y = jnp.dot(a.astype(COMPUTE_DTYPE), wl,
                        preferred_element_type=jnp.float32)
            y_ref[rows, :] = y
            return (ssum + jnp.sum(y, axis=0, keepdims=True),
                    ssq + jnp.sum(y * y, axis=0, keepdims=True))

        carry = lax.fori_loop(0, n_tiles - 1, gemm_tile, (zeros, zeros))
        ssum, ssq = gemm_tile(n_tiles - 1, carry, mask=row_mask)  # masked last tile
        scale, shift = _scale_shift(ssum, ssq, gamma_ref[pl.ds(layer, 1), :],
                                    beta_ref[pl.ds(layer, 1), :], inv_m)

    # ---- final BN+ReLU epilogue: write only the valid output channels.
    def out_tile(i, carry):
        rows = _rows(i, tm)
        o = jnp.maximum(y_ref[rows, :] * scale + shift, 0.0)
        out_ref[rows, :] = o[:, :cout]
        return carry

    lax.fori_loop(0, n_tiles, out_tile, 0)


# -------------------------------- wrapper -----------------------------------

def _encoder_tracks(x_tracks, weights, gammas, betas, *, tm=1024):
    """Run the encoder on T stacked tracks. x_tracks: (T, N, C0, H, W) NCHW."""
    T, N, C0, H, W = x_tracks.shape
    n_layers = len(weights)
    cout = weights[-1].shape[0]
    M = N * H * W

    tm = max(8, _round_up(int(tm), 8))
    tm_eff = min(tm, _round_up(M, 8))
    n_tiles = pl.cdiv(M, tm_eff)
    Mp = n_tiles * tm_eff

    # VMEM-residency guard for the fused kernel (slab + double-buffered IO).
    vmem_need = Mp * CP * 4 + 2 * (Mp * C0 * 4 + Mp * cout * 4)
    if vmem_need > 30 * 1024 * 1024:
        # TODO(synk): streaming HBM-tiled fallback for very large N*H*W.
        raise NotImplementedError(
            "activation slab too large for the VMEM-resident fused kernel")

    # NCHW -> channels-last rows (T, M, C0); pad rows only (NO 128-lane pad).
    x = jnp.transpose(x_tracks, (0, 1, 3, 4, 2)).reshape(T, M, C0)
    x = jnp.pad(x.astype(jnp.float32), ((0, 0), (0, Mp - M), (0, 0)))

    # Parameters: channel axes zero-padded to CP lanes.
    w0mat = weights[0][:, :, 0, 0].T.astype(jnp.float32)          # (C0, C1)
    w0 = jnp.pad(w0mat, ((0, 0), (0, CP - w0mat.shape[1])))       # (C0, CP)
    w_rest = jnp.stack([
        jnp.pad(w[:, :, 0, 0].T.astype(jnp.float32),
                ((0, CP - w.shape[1]), (0, CP - w.shape[0])))
        for w in weights[1:]]).astype(COMPUTE_DTYPE)              # (L-1, CP, CP)
    gam = jnp.stack([jnp.pad(g.astype(jnp.float32), (0, CP - g.shape[0]))
                     for g in gammas])                            # (L, CP)
    bet = jnp.stack([jnp.pad(b.astype(jnp.float32), (0, CP - b.shape[0]))
                     for b in betas])                             # (L, CP)

    kernel = functools.partial(
        fused_track_kernel, m_true=M, tm=tm_eff, n_tiles=n_tiles,
        n_layers=n_layers, c0=C0, cout=cout)

    cost = pl.CostEstimate(
        flops=2 * T * Mp * CP * CP * (n_layers - 1) + 4 * T * Mp * CP,
        transcendentals=T * n_layers * CP,
        bytes_accessed=x.size * 4 + T * Mp * cout * 4 + w_rest.size * 2)

    out = pl.pallas_call(
        kernel,
        grid=(T,),
        in_specs=[
            pl.BlockSpec((pl.Squeezed(), Mp, C0), lambda t: (t, 0, 0)),
            pl.BlockSpec((C0, CP), lambda t: (0, 0)),
            pl.BlockSpec((n_layers - 1, CP, CP), lambda t: (0, 0, 0)),
            pl.BlockSpec((n_layers, CP), lambda t: (0, 0)),
            pl.BlockSpec((n_layers, CP), lambda t: (0, 0)),
        ],
        out_specs=pl.BlockSpec((pl.Squeezed(), Mp, cout), lambda t: (t, 0, 0)),
        out_shape=jax.ShapeDtypeStruct((T, Mp, cout), jnp.float32),
        scratch_shapes=[pltpu.VMEM((Mp, CP), jnp.float32)],
        compiler_params=pltpu.CompilerParams(
            dimension_semantics=("parallel",),     # 2 tracks -> 2 TCs on v7x
            vmem_limit_bytes=40 * 1024 * 1024),
        cost_estimate=cost,
    )(x, w0, w_rest, gam, bet)

    out = out[:, :M, :].reshape(T, N, H, W, cout)
    return jnp.transpose(out, (0, 1, 4, 2, 3))                    # (T,N,C,H,W)


def encoder_subtrack_d_forward(a, b, params, *, tm=1024):
    """torch.concat((track(a), track(b)), dim=0) with per-track BN stats."""
    weights, gammas, betas = params
    if a.shape == b.shape:
        x = jnp.stack([a, b], axis=0)
        y = _encoder_tracks(x, weights, gammas, betas, tm=tm)
        return y.reshape((-1,) + y.shape[2:])
    ya = _encoder_tracks(a[None], weights, gammas, betas, tm=tm)[0]
    yb = _encoder_tracks(b[None], weights, gammas, betas, tm=tm)[0]
    return jnp.concatenate([ya, yb], axis=0)


# ------------------------------- reference ----------------------------------

def encoder_track_reference(x_nchw, weights, gammas, betas):
    """Pure-JAX reference emulating the kernel's precision policy
    (f32 layer-0 MAC, bf16 matmul operands for later layers, f32 BN/ReLU)."""
    x = jnp.transpose(x_nchw, (0, 2, 3, 1)).astype(jnp.float32)   # NHWC
    N, H, W, _ = x.shape
    for layer, (w, g, b) in enumerate(zip(weights, gammas, betas)):
        wmat = w[:, :, 0, 0].T.astype(jnp.float32)                # (Cin, Cout)
        a2 = x.reshape(-1, x.shape[-1])
        if layer == 0:
            y = jnp.dot(a2, wmat, precision=lax.Precision.HIGHEST)
        else:
            y = jnp.dot(a2.astype(COMPUTE_DTYPE).astype(jnp.float32),
                        wmat.astype(COMPUTE_DTYPE).astype(jnp.float32),
                        precision=lax.Precision.HIGHEST)
        mean = y.mean(axis=0, keepdims=True)
        var = ((y - mean) ** 2).mean(axis=0, keepdims=True)       # biased
        y = (y - mean) * lax.rsqrt(var + BN_EPS) * g + b
        y = jnp.maximum(y, 0.0)
        x = y.reshape(N, H, W, -1)
    return jnp.transpose(x, (0, 3, 1, 2))


def encoder_subtrack_d_reference(a, b, params):
    weights, gammas, betas = params
    return jnp.concatenate(
        [encoder_track_reference(a, weights, gammas, betas),
         encoder_track_reference(b, weights, gammas, betas)], axis=0)


# --------------------------------- demo --------------------------------------

if __name__ == "__main__":
    key = jax.random.PRNGKey(0)
    keys = jax.random.split(key, 16)

    # W=15 makes M = N*H*W = 480 a non-multiple of the 128-row demo tile, so
    # the multi-tile path and the masked partial last tile are both exercised.
    N, H, W = 2, 16, 15
    channels = [1, 4, 8, 16, 32]

    a = jax.random.normal(keys[0], (N, 1, H, W), dtype=jnp.float32)
    b = jax.random.normal(keys[1], (N, 1, H, W), dtype=jnp.float32)

    weights, gammas, betas = [], [], []
    for layer in range(4):
        cin, cout = channels[layer], channels[layer + 1]
        weights.append(0.5 * jax.random.normal(
            keys[2 + 3 * layer], (cout, cin, 1, 1), dtype=jnp.float32))
        gammas.append(1.0 + 0.1 * jax.random.normal(
            keys[3 + 3 * layer], (cout,), dtype=jnp.float32))
        betas.append(0.1 * jax.random.normal(
            keys[4 + 3 * layer], (cout,), dtype=jnp.float32))
    params = (weights, gammas, betas)

    # Small demo tile (128 rows) so the in-VMEM tile loop runs several
    # iterations plus a masked partial tile; production default is tm=1024.
    fwd = jax.jit(functools.partial(encoder_subtrack_d_forward, tm=128))
    out = fwd(a, b, params)
    out = jax.block_until_ready(out)

    ref = encoder_subtrack_d_reference(a, b, params)
    assert out.shape == (2 * N, 32, H, W), out.shape
    max_err = float(jnp.max(jnp.abs(out - ref)))
    # Tolerance reflects bf16 MXU operands (accumulation-order / rounding).
    assert jnp.allclose(out, ref, atol=2e-2, rtol=2e-2), max_err

    print("KERNEL_OK")
</pallas_src>

<mosaic_0001>
module attributes {stable_mosaic.version = 11 : i64} {
  func.func @fused_track_kernel(%arg0: i32, %arg1: memref<1x512x1xf32, #tpu.memory_space<vmem>>, %arg2: memref<1x128xf32, #tpu.memory_space<vmem>>, %arg3: memref<3x128x128xbf16, #tpu.memory_space<vmem>>, %arg4: memref<4x128xf32, #tpu.memory_space<vmem>>, %arg5: memref<4x128xf32, #tpu.memory_space<vmem>>, %arg6: memref<1x512x32xf32, #tpu.memory_space<vmem>>, %arg7: memref<512x128xf32, #tpu.memory_space<vmem>>) attributes {dimension_semantics = [#tpu.dimension_semantics<parallel>], iteration_bounds = array<i64: 2>, scalar_prefetch = 0 : i64, scratch_operands = 1 : i64, tpu.core_type = #tpu.core_type<tc>, window_params = [{transform_indices = @transform_0, window_bounds = array<i64: 1, 512, 1>}, {pipeline_mode = #tpu.pipeline_mode<synchronous>, transform_indices = @transform_1, window_bounds = array<i64: 1, 128>}, {pipeline_mode = #tpu.pipeline_mode<synchronous>, transform_indices = @transform_2, window_bounds = array<i64: 3, 128, 128>}, {pipeline_mode = #tpu.pipeline_mode<synchronous>, transform_indices = @transform_3, window_bounds = array<i64: 4, 128>}, {pipeline_mode = #tpu.pipeline_mode<synchronous>, transform_indices = @transform_4, window_bounds = array<i64: 4, 128>}, {transform_indices = @transform_5, window_bounds = array<i64: 1, 512, 32>}]} {
    %cst = arith.constant 0.000000e+00 : f32
    %0 = vector.broadcast %cst : f32 to vector<1x128xf32>
    %1 = tpu.iota {dimensions = array<i32: 0>} : vector<128x1xi32>
    %c96_i32 = arith.constant 96 : i32
    %2 = vector.broadcast %c96_i32 : i32 to vector<128x1xi32>
    %3 = arith.cmpi slt, %1, %2 : vector<128x1xi32>
    %4 = arith.extui %3 : vector<128x1xi1> to vector<128x1xi32>
    %5 = arith.sitofp %4 : vector<128x1xi32> to vector<128x1xf32>
    %c0 = arith.constant 0 : index
    %c0_0 = arith.constant 0 : index
    %6 = vector.load %arg2[%c0, %c0_0] : memref<1x128xf32, #tpu.memory_space<vmem>>, vector<1x128xf32>
    %c0_i32 = arith.constant 0 : i32
    %c4_i32 = arith.constant 4 : i32
    %7 = arith.addi %c0_i32, %c4_i32 : i32
    %c1_i32 = arith.constant 1 : i32
    %8:2 = scf.for %arg8 = %c0_i32 to %7 step %c1_i32 iter_args(%arg9 = %0, %arg10 = %0) -> (vector<1x128xf32>, vector<1x128xf32>)  : i32 {
      %c128_i32 = arith.constant 128 : i32
      %143 = arith.muli %arg8, %c128_i32 : i32
      %144 = tpu.assume_multiple %143, 8 : i32
      %c0_78 = arith.constant 0 : index
      %145 = arith.index_cast %144 : i32 to index
      %c0_79 = arith.constant 0 : index
      %146 = vector.load %arg1[%c0_78, %145, %c0_79] : memref<1x512x1xf32, #tpu.memory_space<vmem>>, vector<1x128x1xf32>
      %147 = vector.shape_cast %146 : vector<1x128x1xf32> to vector<128x1xf32>
      %148 = vector.broadcast %147 : vector<128x1xf32> to vector<128x128xf32>
      %149 = vector.broadcast %6 : vector<1x128xf32> to vector<128x128xf32>
      %150 = arith.mulf %148, %149 : vector<128x128xf32>
      %151 = arith.index_cast %144 : i32 to index
      %c0_80 = arith.constant 0 : index
      %152 = vector.load %arg7[%151, %c0_80] : memref<512x128xf32, #tpu.memory_space<vmem>>, vector<128x128xf32>
      tpu.vector_store %arg7[%151, %c0_80], %150 {strides = array<i32>} : memref<512x128xf32, #tpu.memory_space<vmem>>, vector<128x128xf32>,
      %cst_81 = arith.constant dense<0.000000e+00> : vector<128xf32>
      %153 = vector.multi_reduction <add>, %150, %cst_81 [0] : vector<128x128xf32> to vector<128xf32>
      %154 = vector.shape_cast %153 : vector<128xf32> to vector<1x128xf32>
      %155 = arith.addf %arg9, %154 : vector<1x128xf32>
      %156 = arith.mulf %150, %150 : vector<128x128xf32>
      %cst_82 = arith.constant dense<0.000000e+00> : vector<128xf32>
      %157 = vector.multi_reduction <add>, %156, %cst_82 [0] : vector<128x128xf32> to vector<128xf32>
      %158 = vector.shape_cast %157 : vector<128xf32> to vector<1x128xf32>
      %159 = arith.addf %arg10, %158 : vector<1x128xf32>
      scf.yield %155, %159 : vector<1x128xf32>, vector<1x128xf32>
    }
    %c4_i32_1 = arith.constant 4 : i32
    %c0_2 = arith.constant 0 : index
    %c0_3 = arith.constant 0 : index
    %9 = vector.load %arg4[%c0_2, %c0_3] : memref<4x128xf32, #tpu.memory_space<vmem>>, vector<1x128xf32>
    %c0_4 = arith.constant 0 : index
    %c0_5 = arith.constant 0 : index
    %10 = vector.load %arg5[%c0_4, %c0_5] : memref<4x128xf32, #tpu.memory_space<vmem>>, vector<1x128xf32>
    %cst_6 = arith.constant 0.00208333344 : f32
    %11 = vector.broadcast %cst_6 : f32 to vector<1x128xf32>
    %12 = arith.mulf %8#0, %11 : vector<1x128xf32>
    %cst_7 = arith.constant 0.00208333344 : f32
    %13 = vector.broadcast %cst_7 : f32 to vector<1x128xf32>
    %14 = arith.mulf %8#1, %13 : vector<1x128xf32>
    %15 = arith.mulf %12, %12 : vector<1x128xf32>
    %16 = arith.subf %14, %15 : vector<1x128xf32>
    %cst_8 = arith.constant 0.000000e+00 : f32
    %17 = vector.broadcast %cst_8 : f32 to vector<1x128xf32>
    %18 = arith.maximumf %16, %17 : vector<1x128xf32>
    %cst_9 = arith.constant 9.99999974E-6 : f32
    %19 = vector.broadcast %cst_9 : f32 to vector<1x128xf32>
    %20 = arith.addf %18, %19 : vector<1x128xf32>
    %21 = math.rsqrt %20 : vector<1x128xf32>
    %22 = arith.mulf %9, %21 : vector<1x128xf32>
    %23 = arith.mulf %12, %22 : vector<1x128xf32>
    %24 = arith.subf %10, %23 : vector<1x128xf32>
    %c0_10 = arith.constant 0 : index
    %c0_11 = arith.constant 0 : index
    %c0_12 = arith.constant 0 : index
    %25 = vector.load %arg3[%c0_10, %c0_11, %c0_12] : memref<3x128x128xbf16, #tpu.memory_space<vmem>>, vector<1x128x128xbf16>
    %26 = vector.shape_cast %25 : vector<1x128x128xbf16> to vector<128x128xbf16>
    %c0_i32_13 = arith.constant 0 : i32
    %c3_i32 = arith.constant 3 : i32
    %27 = arith.addi %c0_i32_13, %c3_i32 : i32
    %c1_i32_14 = arith.constant 1 : i32
    %28:2 = scf.for %arg8 = %c0_i32_13 to %27 step %c1_i32_14 iter_args(%arg9 = %0, %arg10 = %0) -> (vector<1x128xf32>, vector<1x128xf32>)  : i32 {
      %c128_i32 = arith.constant 128 : i32
      %143 = arith.muli %arg8, %c128_i32 : i32
      %144 = tpu.assume_multiple %143, 8 : i32
      %145 = arith.index_cast %144 : i32 to index
      %c0_78 = arith.constant 0 : index
      %146 = vector.load %arg7[%145, %c0_78] : memref<512x128xf32, #tpu.memory_space<vmem>>, vector<128x128xf32>
      %147 = vector.broadcast %22 : vector<1x128xf32> to vector<128x128xf32>
      %148 = arith.mulf %146, %147 : vector<128x128xf32>
      %149 = vector.broadcast %24 : vector<1x128xf32> to vector<128x128xf32>
      %150 = arith.addf %148, %149 : vector<128x128xf32>
      %cst_79 = arith.constant 0.000000e+00 : f32
      %151 = vector.broadcast %cst_79 : f32 to vector<128x128xf32>
      %152 = arith.maximumf %150, %151 : vector<128x128xf32>
      %153 = arith.truncf %152 : vector<128x128xf32> to vector<128x128xbf16>
      %cst_80 = arith.constant dense<0.000000e+00> : vector<128x128xf32>
      %154 = tpu.matmul %153, %26, %cst_80 {dimension_numbers = #tpu.dot_dimension_numbers<[1], [0], [0], [1], [0, 0, 1, 1], [], []>} : vector<128x128xbf16>, vector<128x128xbf16>, vector<128x128xf32> -> vector<128x128xf32>
      %155 = arith.index_cast %144 : i32 to index
      %c0_81 = arith.constant 0 : index
      %156 = vector.load %arg7[%155, %c0_81] : memref<512x128xf32, #tpu.memory_space<vmem>>, vector<128x128xf32>
      tpu.vector_store %arg7[%155, %c0_81], %154 {strides = array<i32>} : memref<512x128xf32, #tpu.memory_space<vmem>>, vector<128x128xf32>,
      %cst_82 = arith.constant dense<0.000000e+00> : vector<128xf32>
      %157 = vector.multi_reduction <add>, %154, %cst_82 [0] : vector<128x128xf32> to vector<128xf32>
      %158 = vector.shape_cast %157 : vector<128xf32> to vector<1x128xf32>
      %159 = arith.addf %arg9, %158 : vector<1x128xf32>
      %160 = arith.mulf %154, %154 : vector<128x128xf32>
      %cst_83 = arith.constant dense<0.000000e+00> : vector<128xf32>
      %161 = vector.multi_reduction <add>, %160, %cst_83 [0] : vector<128x128xf32> to vector<128xf32>
      %162 = vector.shape_cast %161 : vector<128xf32> to vector<1x128xf32>
      %163 = arith.addf %arg10, %162 : vector<1x128xf32>
      scf.yield %159, %163 : vector<1x128xf32>, vector<1x128xf32>
    }
    %c3_i32_15 = arith.constant 3 : i32
    %c384 = arith.constant 384 : index
    %c0_16 = arith.constant 0 : index
    %29 = vector.load %arg7[%c384, %c0_16] : memref<512x128xf32, #tpu.memory_space<vmem>>, vector<128x128xf32>
    %30 = vector.broadcast %22 : vector<1x128xf32> to vector<128x128xf32>
    %31 = arith.mulf %29, %30 : vector<128x128xf32>
    %32 = vector.broadcast %24 : vector<1x128xf32> to vector<128x128xf32>
    %33 = arith.addf %31, %32 : vector<128x128xf32>
    %cst_17 = arith.constant 0.000000e+00 : f32
    %34 = vector.broadcast %cst_17 : f32 to vector<128x128xf32>
    %35 = arith.maximumf %33, %34 : vector<128x128xf32>
    %36 = vector.broadcast %5 : vector<128x1xf32> to vector<128x128xf32>
    %37 = arith.mulf %35, %36 : vector<128x128xf32>
    %38 = arith.truncf %37 : vector<128x128xf32> to vector<128x128xbf16>
    %cst_18 = arith.constant dense<0.000000e+00> : vector<128x128xf32>
    %39 = tpu.matmul %38, %26, %cst_18 {dimension_numbers = #tpu.dot_dimension_numbers<[1], [0], [0], [1], [0, 0, 1, 1], [], []>} : vector<128x128xbf16>, vector<128x128xbf16>, vector<128x128xf32> -> vector<128x128xf32>
    %c384_19 = arith.constant 384 : index
    %c0_20 = arith.constant 0 : index
    %40 = vector.load %arg7[%c384_19, %c0_20] : memref<512x128xf32, #tpu.memory_space<vmem>>, vector<128x128xf32>
    tpu.vector_store %arg7[%c384_19, %c0_20], %39 {strides = array<i32>} : memref<512x128xf32, #tpu.memory_space<vmem>>, vector<128x128xf32>,
    %cst_21 = arith.constant dense<0.000000e+00> : vector<128xf32>
    %41 = vector.multi_reduction <add>, %39, %cst_21 [0] : vector<128x128xf32> to vector<128xf32>
    %42 = vector.shape_cast %41 : vector<128xf32> to vector<1x128xf32>
    %43 = arith.addf %28#0, %42 : vector<1x128xf32>
    %44 = arith.mulf %39, %39 : vector<128x128xf32>
    %cst_22 = arith.constant dense<0.000000e+00> : vector<128xf32>
    %45 = vector.multi_reduction <add>, %44, %cst_22 [0] : vector<128x128xf32> to vector<128xf32>
    %46 = vector.shape_cast %45 : vector<128xf32> to vector<1x128xf32>
    %47 = arith.addf %28#1, %46 : vector<1x128xf32>
    %c1 = arith.constant 1 : index
    %c0_23 = arith.constant 0 : index
    %48 = vector.load %arg4[%c1, %c0_23] : memref<4x128xf32, #tpu.memory_space<vmem>>, vector<1x128xf32>
    %c1_24 = arith.constant 1 : index
    %c0_25 = arith.constant 0 : index
    %49 = vector.load %arg5[%c1_24, %c0_25] : memref<4x128xf32, #tpu.memory_space<vmem>>, vector<1x128xf32>
    %cst_26 = arith.constant 0.00208333344 : f32
    %50 = vector.broadcast %cst_26 : f32 to vector<1x128xf32>
    %51 = arith.mulf %43, %50 : vector<1x128xf32>
    %cst_27 = arith.constant 0.00208333344 : f32
    %52 = vector.broadcast %cst_27 : f32 to vector<1x128xf32>
    %53 = arith.mulf %47, %52 : vector<1x128xf32>
    %54 = arith.mulf %51, %51 : vector<1x128xf32>
    %55 = arith.subf %53, %54 : vector<1x128xf32>
    %cst_28 = arith.constant 0.000000e+00 : f32
    %56 = vector.broadcast %cst_28 : f32 to vector<1x128xf32>
    %57 = arith.maximumf %55, %56 : vector<1x128xf32>
    %cst_29 = arith.constant 9.99999974E-6 : f32
    %58 = vector.broadcast %cst_29 : f32 to vector<1x128xf32>
    %59 = arith.addf %57, %58 : vector<1x128xf32>
    %60 = math.rsqrt %59 : vector<1x128xf32>
    %61 = arith.mulf %48, %60 : vector<1x128xf32>
    %62 = arith.mulf %51, %61 : vector<1x128xf32>
    %63 = arith.subf %49, %62 : vector<1x128xf32>
    %c1_30 = arith.constant 1 : index
    %c0_31 = arith.constant 0 : index
    %c0_32 = arith.constant 0 : index
    %64 = vector.load %arg3[%c1_30, %c0_31, %c0_32] : memref<3x128x128xbf16, #tpu.memory_space<vmem>>, vector<1x128x128xbf16>
    %65 = vector.shape_cast %64 : vector<1x128x128xbf16> to vector<128x128xbf16>
    %c0_i32_33 = arith.constant 0 : i32
    %c3_i32_34 = arith.constant 3 : i32
    %66 = arith.addi %c0_i32_33, %c3_i32_34 : i32
    %c1_i32_35 = arith.constant 1 : i32
    %67:2 = scf.for %arg8 = %c0_i32_33 to %66 step %c1_i32_35 iter_args(%arg9 = %0, %arg10 = %0) -> (vector<1x128xf32>, vector<1x128xf32>)  : i32 {
      %c128_i32 = arith.constant 128 : i32
      %143 = arith.muli %arg8, %c128_i32 : i32
      %144 = tpu.assume_multiple %143, 8 : i32
      %145 = arith.index_cast %144 : i32 to index
      %c0_78 = arith.constant 0 : index
      %146 = vector.load %arg7[%145, %c0_78] : memref<512x128xf32, #tpu.memory_space<vmem>>, vector<128x128xf32>
      %147 = vector.broadcast %61 : vector<1x128xf32> to vector<128x128xf32>
      %148 = arith.mulf %146, %147 : vector<128x128xf32>
      %149 = vector.broadcast %63 : vector<1x128xf32> to vector<128x128xf32>
      %150 = arith.addf %148, %149 : vector<128x128xf32>
      %cst_79 = arith.constant 0.000000e+00 : f32
      %151 = vector.broadcast %cst_79 : f32 to vector<128x128xf32>
      %152 = arith.maximumf %150, %151 : vector<128x128xf32>
      %153 = arith.truncf %152 : vector<128x128xf32> to vector<128x128xbf16>
      %cst_80 = arith.constant dense<0.000000e+00> : vector<128x128xf32>
      %154 = tpu.matmul %153, %65, %cst_80 {dimension_numbers = #tpu.dot_dimension_numbers<[1], [0], [0], [1], [0, 0, 1, 1], [], []>} : vector<128x128xbf16>, vector<128x128xbf16>, vector<128x128xf32> -> vector<128x128xf32>
      %155 = arith.index_cast %144 : i32 to index
      %c0_81 = arith.constant 0 : index
      %156 = vector.load %arg7[%155, %c0_81] : memref<512x128xf32, #tpu.memory_space<vmem>>, vector<128x128xf32>
      tpu.vector_store %arg7[%155, %c0_81], %154 {strides = array<i32>} : memref<512x128xf32, #tpu.memory_space<vmem>>, vector<128x128xf32>,
      %cst_82 = arith.constant dense<0.000000e+00> : vector<128xf32>
      %157 = vector.multi_reduction <add>, %154, %cst_82 [0] : vector<128x128xf32> to vector<128xf32>
      %158 = vector.shape_cast %157 : vector<128xf32> to vector<1x128xf32>
      %159 = arith.addf %arg9, %158 : vector<1x128xf32>
      %160 = arith.mulf %154, %154 : vector<128x128xf32>
      %cst_83 = arith.constant dense<0.000000e+00> : vector<128xf32>
      %161 = vector.multi_reduction <add>, %160, %cst_83 [0] : vector<128x128xf32> to vector<128xf32>
      %162 = vector.shape_cast %161 : vector<128xf32> to vector<1x128xf32>
      %163 = arith.addf %arg10, %162 : vector<1x128xf32>
      scf.yield %159, %163 : vector<1x128xf32>, vector<1x128xf32>
    }
    %c3_i32_36 = arith.constant 3 : i32
    %c384_37 = arith.constant 384 : index
    %c0_38 = arith.constant 0 : index
    %68 = vector.load %arg7[%c384_37, %c0_38] : memref<512x128xf32, #tpu.memory_space<vmem>>, vector<128x128xf32>
    %69 = vector.broadcast %61 : vector<1x128xf32> to vector<128x128xf32>
    %70 = arith.mulf %68, %69 : vector<128x128xf32>
    %71 = vector.broadcast %63 : vector<1x128xf32> to vector<128x128xf32>
    %72 = arith.addf %70, %71 : vector<128x128xf32>
    %cst_39 = arith.constant 0.000000e+00 : f32
    %73 = vector.broadcast %cst_39 : f32 to vector<128x128xf32>
    %74 = arith.maximumf %72, %73 : vector<128x128xf32>
    %75 = vector.broadcast %5 : vector<128x1xf32> to vector<128x128xf32>
    %76 = arith.mulf %74, %75 : vector<128x128xf32>
    %77 = arith.truncf %76 : vector<128x128xf32> to vector<128x128xbf16>
    %cst_40 = arith.constant dense<0.000000e+00> : vector<128x128xf32>
    %78 = tpu.matmul %77, %65, %cst_40 {dimension_numbers = #tpu.dot_dimension_numbers<[1], [0], [0], [1], [0, 0, 1, 1], [], []>} : vector<128x128xbf16>, vector<128x128xbf16>, vector<128x128xf32> -> vector<128x128xf32>
    %c384_41 = arith.constant 384 : index
    %c0_42 = arith.constant 0 : index
    %79 = vector.load %arg7[%c384_41, %c0_42] : memref<512x128xf32, #tpu.memory_space<vmem>>, vector<128x128xf32>
    tpu.vector_store %arg7[%c384_41, %c0_42], %78 {strides = array<i32>} : memref<512x128xf32, #tpu.memory_space<vmem>>, vector<128x128xf32>,
    %cst_43 = arith.constant dense<0.000000e+00> : vector<128xf32>
    %80 = vector.multi_reduction <add>, %78, %cst_43 [0] : vector<128x128xf32> to vector<128xf32>
    %81 = vector.shape_cast %80 : vector<128xf32> to vector<1x128xf32>
    %82 = arith.addf %67#0, %81 : vector<1x128xf32>
    %83 = arith.mulf %78, %78 : vector<128x128xf32>
    %cst_44 = arith.constant dense<0.000000e+00> : vector<128xf32>
    %84 = vector.multi_reduction <add>, %83, %cst_44 [0] : vector<128x128xf32> to vector<128xf32>
    %85 = vector.shape_cast %84 : vector<128xf32> to vector<1x128xf32>
    %86 = arith.addf %67#1, %85 : vector<1x128xf32>
    %c2 = arith.constant 2 : index
    %c0_45 = arith.constant 0 : index
    %87 = vector.load %arg4[%c2, %c0_45] : memref<4x128xf32, #tpu.memory_space<vmem>>, vector<1x128xf32>
    %c2_46 = arith.constant 2 : index
    %c0_47 = arith.constant 0 : index
    %88 = vector.load %arg5[%c2_46, %c0_47] : memref<4x128xf32, #tpu.memory_space<vmem>>, vector<1x128xf32>
    %cst_48 = arith.constant 0.00208333344 : f32
    %89 = vector.broadcast %cst_48 : f32 to vector<1x128xf32>
    %90 = arith.mulf %82, %89 : vector<1x128xf32>
    %cst_49 = arith.constant 0.00208333344 : f32
    %91 = vector.broadcast %cst_49 : f32 to vector<1x128xf32>
    %92 = arith.mulf %86, %91 : vector<1x128xf32>
    %93 = arith.mulf %90, %90 : vector<1x128xf32>
    %94 = arith.subf %92, %93 : vector<1x128xf32>
    %cst_50 = arith.constant 0.000000e+00 : f32
    %95 = vector.broadcast %cst_50 : f32 to vector<1x128xf32>
    %96 = arith.maximumf %94, %95 : vector<1x128xf32>
    %cst_51 = arith.constant 9.99999974E-6 : f32
    %97 = vector.broadcast %cst_51 : f32 to vector<1x128xf32>
    %98 = arith.addf %96, %97 : vector<1x128xf32>
    %99 = math.rsqrt %98 : vector<1x128xf32>
    %100 = arith.mulf %87, %99 : vector<1x128xf32>
    %101 = arith.mulf %90, %100 : vector<1x128xf32>
    %102 = arith.subf %88, %101 : vector<1x128xf32>
    %c2_52 = arith.constant 2 : index
    %c0_53 = arith.constant 0 : index
    %c0_54 = arith.constant 0 : index
    %103 = vector.load %arg3[%c2_52, %c0_53, %c0_54] : memref<3x128x128xbf16, #tpu.memory_space<vmem>>, vector<1x128x128xbf16>
    %104 = vector.shape_cast %103 : vector<1x128x128xbf16> to vector<128x128xbf16>
    %c0_i32_55 = arith.constant 0 : i32
    %c3_i32_56 = arith.constant 3 : i32
    %105 = arith.addi %c0_i32_55, %c3_i32_56 : i32
    %c1_i32_57 = arith.constant 1 : i32
    %106:2 = scf.for %arg8 = %c0_i32_55 to %105 step %c1_i32_57 iter_args(%arg9 = %0, %arg10 = %0) -> (vector<1x128xf32>, vector<1x128xf32>)  : i32 {
      %c128_i32 = arith.constant 128 : i32
      %143 = arith.muli %arg8, %c128_i32 : i32
      %144 = tpu.assume_multiple %143, 8 : i32
      %145 = arith.index_cast %144 : i32 to index
      %c0_78 = arith.constant 0 : index
      %146 = vector.load %arg7[%145, %c0_78] : memref<512x128xf32, #tpu.memory_space<vmem>>, vector<128x128xf32>
      %147 = vector.broadcast %100 : vector<1x128xf32> to vector<128x128xf32>
      %148 = arith.mulf %146, %147 : vector<128x128xf32>
      %149 = vector.broadcast %102 : vector<1x128xf32> to vector<128x128xf32>
      %150 = arith.addf %148, %149 : vector<128x128xf32>
      %cst_79 = arith.constant 0.000000e+00 : f32
      %151 = vector.broadcast %cst_79 : f32 to vector<128x128xf32>
      %152 = arith.maximumf %150, %151 : vector<128x128xf32>
      %153 = arith.truncf %152 : vector<128x128xf32> to vector<128x128xbf16>
      %cst_80 = arith.constant dense<0.000000e+00> : vector<128x128xf32>
      %154 = tpu.matmul %153, %104, %cst_80 {dimension_numbers = #tpu.dot_dimension_numbers<[1], [0], [0], [1], [0, 0, 1, 1], [], []>} : vector<128x128xbf16>, vector<128x128xbf16>, vector<128x128xf32> -> vector<128x128xf32>
      %155 = arith.index_cast %144 : i32 to index
      %c0_81 = arith.constant 0 : index
      %156 = vector.load %arg7[%155, %c0_81] : memref<512x128xf32, #tpu.memory_space<vmem>>, vector<128x128xf32>
      tpu.vector_store %arg7[%155, %c0_81], %154 {strides = array<i32>} : memref<512x128xf32, #tpu.memory_space<vmem>>, vector<128x128xf32>,
      %cst_82 = arith.constant dense<0.000000e+00> : vector<128xf32>
      %157 = vector.multi_reduction <add>, %154, %cst_82 [0] : vector<128x128xf32> to vector<128xf32>
      %158 = vector.shape_cast %157 : vector<128xf32> to vector<1x128xf32>
      %159 = arith.addf %arg9, %158 : vector<1x128xf32>
      %160 = arith.mulf %154, %154 : vector<128x128xf32>
      %cst_83 = arith.constant dense<0.000000e+00> : vector<128xf32>
      %161 = vector.multi_reduction <add>, %160, %cst_83 [0] : vector<128x128xf32> to vector<128xf32>
      %162 = vector.shape_cast %161 : vector<128xf32> to vector<1x128xf32>
      %163 = arith.addf %arg10, %162 : vector<1x128xf32>
      scf.yield %159, %163 : vector<1x128xf32>, vector<1x128xf32>
    }
    %c3_i32_58 = arith.constant 3 : i32
    %c384_59 = arith.constant 384 : index
    %c0_60 = arith.constant 0 : index
    %107 = vector.load %arg7[%c384_59, %c0_60] : memref<512x128xf32, #tpu.memory_space<vmem>>, vector<128x128xf32>
    %108 = vector.broadcast %100 : vector<1x128xf32> to vector<128x128xf32>
    %109 = arith.mulf %107, %108 : vector<128x128xf32>
    %110 = vector.broadcast %102 : vector<1x128xf32> to vector<128x128xf32>
    %111 = arith.addf %109, %110 : vector<128x128xf32>
    %cst_61 = arith.constant 0.000000e+00 : f32
    %112 = vector.broadcast %cst_61 : f32 to vector<128x128xf32>
    %113 = arith.maximumf %111, %112 : vector<128x128xf32>
    %114 = vector.broadcast %5 : vector<128x1xf32> to vector<128x128xf32>
    %115 = arith.mulf %113, %114 : vector<128x128xf32>
    %116 = arith.truncf %115 : vector<128x128xf32> to vector<128x128xbf16>
    %cst_62 = arith.constant dense<0.000000e+00> : vector<128x128xf32>
    %117 = tpu.matmul %116, %104, %cst_62 {dimension_numbers = #tpu.dot_dimension_numbers<[1], [0], [0], [1], [0, 0, 1, 1], [], []>} : vector<128x128xbf16>, vector<128x128xbf16>, vector<128x128xf32> -> vector<128x128xf32>
    %c384_63 = arith.constant 384 : index
    %c0_64 = arith.constant 0 : index
    %118 = vector.load %arg7[%c384_63, %c0_64] : memref<512x128xf32, #tpu.memory_space<vmem>>, vector<128x128xf32>
    tpu.vector_store %arg7[%c384_63, %c0_64], %117 {strides = array<i32>} : memref<512x128xf32, #tpu.memory_space<vmem>>, vector<128x128xf32>,
    %cst_65 = arith.constant dense<0.000000e+00> : vector<128xf32>
    %119 = vector.multi_reduction <add>, %117, %cst_65 [0] : vector<128x128xf32> to vector<128xf32>
    %120 = vector.shape_cast %119 : vector<128xf32> to vector<1x128xf32>
    %121 = arith.addf %106#0, %120 : vector<1x128xf32>
    %122 = arith.mulf %117, %117 : vector<128x128xf32>
    %cst_66 = arith.constant dense<0.000000e+00> : vector<128xf32>
    %123 = vector.multi_reduction <add>, %122, %cst_66 [0] : vector<128x128xf32> to vector<128xf32>
    %124 = vector.shape_cast %123 : vector<128xf32> to vector<1x128xf32>
    %125 = arith.addf %106#1, %124 : vector<1x128xf32>
    %c3 = arith.constant 3 : index
    %c0_67 = arith.constant 0 : index
    %126 = vector.load %arg4[%c3, %c0_67] : memref<4x128xf32, #tpu.memory_space<vmem>>, vector<1x128xf32>
    %c3_68 = arith.constant 3 : index
    %c0_69 = arith.constant 0 : index
    %127 = vector.load %arg5[%c3_68, %c0_69] : memref<4x128xf32, #tpu.memory_space<vmem>>, vector<1x128xf32>
    %cst_70 = arith.constant 0.00208333344 : f32
    %128 = vector.broadcast %cst_70 : f32 to vector<1x128xf32>
    %129 = arith.mulf %121, %128 : vector<1x128xf32>
    %cst_71 = arith.constant 0.00208333344 : f32
    %130 = vector.broadcast %cst_71 : f32 to vector<1x128xf32>
    %131 = arith.mulf %125, %130 : vector<1x128xf32>
    %132 = arith.mulf %129, %129 : vector<1x128xf32>
    %133 = arith.subf %131, %132 : vector<1x128xf32>
    %cst_72 = arith.constant 0.000000e+00 : f32
    %134 = vector.broadcast %cst_72 : f32 to vector<1x128xf32>
    %135 = arith.maximumf %133, %134 : vector<1x128xf32>
    %cst_73 = arith.constant 9.99999974E-6 : f32
    %136 = vector.broadcast %cst_73 : f32 to vector<1x128xf32>
    %137 = arith.addf %135, %136 : vector<1x128xf32>
    %138 = math.rsqrt %137 : vector<1x128xf32>
    %139 = arith.mulf %126, %138 : vector<1x128xf32>
    %140 = arith.mulf %129, %139 : vector<1x128xf32>
    %141 = arith.subf %127, %140 : vector<1x128xf32>
    %c0_i32_74 = arith.constant 0 : i32
    %c4_i32_75 = arith.constant 4 : i32
    %142 = arith.addi %c0_i32_74, %c4_i32_75 : i32
    %c1_i32_76 = arith.constant 1 : i32
    scf.for %arg8 = %c0_i32_74 to %142 step %c1_i32_76  : i32 {
      %c128_i32 = arith.constant 128 : i32
      %143 = arith.muli %arg8, %c128_i32 : i32
      %144 = tpu.assume_multiple %143, 8 : i32
      %145 = arith.index_cast %144 : i32 to index
      %c0_78 = arith.constant 0 : index
      %146 = vector.load %arg7[%145, %c0_78] : memref<512x128xf32, #tpu.memory_space<vmem>>, vector<128x128xf32>
      %147 = vector.broadcast %139 : vector<1x128xf32> to vector<128x128xf32>
      %148 = arith.mulf %146, %147 : vector<128x128xf32>
      %149 = vector.broadcast %141 : vector<1x128xf32> to vector<128x128xf32>
      %150 = arith.addf %148, %149 : vector<128x128xf32>
      %cst_79 = arith.constant 0.000000e+00 : f32
      %151 = vector.broadcast %cst_79 : f32 to vector<128x128xf32>
      %152 = arith.maximumf %150, %151 : vector<128x128xf32>
      %153 = vector.extract_strided_slice %152 {offsets = [0, 0], sizes = [128, 32], strides = [1, 1]} : vector<128x128xf32> to vector<128x32xf32>
      %c0_80 = arith.constant 0 : index
      %154 = arith.index_cast %144 : i32 to index
      %c0_81 = arith.constant 0 : index
      %155 = vector.load %arg6[%c0_80, %154, %c0_81] : memref<1x512x32xf32, #tpu.memory_space<vmem>>, vector<1x128x32xf32>
      %156 = vector.shape_cast %155 : vector<1x128x32xf32> to vector<128x32xf32>
      %157 = vector.shape_cast %153 : vector<128x32xf32> to vector<1x128x32xf32>
      tpu.vector_store %arg6[%c0_80, %154, %c0_81], %157 {strides = array<i32>} : memref<1x512x32xf32, #tpu.memory_space<vmem>>, vector<1x128x32xf32>,
    }
    %c4_i32_77 = arith.constant 4 : i32
    return
  }
  func.func @transform_0(%arg0: i32) -> (i32, i32, i32) {
    %c0_i32 = arith.constant 0 : i32
    %c0_i32_0 = arith.constant 0 : i32
    %c0_i32_1 = arith.constant 0 : i32
    return %arg0, %c0_i32, %c0_i32_0 : i32, i32, i32
  }
  func.func @transform_1(%arg0: i32) -> (i32, i32) {
    %c0_i32 = arith.constant 0 : i32
    %c0_i32_0 = arith.constant 0 : i32
    %c0_i32_1 = arith.constant 0 : i32
    return %c0_i32, %c0_i32_0 : i32, i32
  }
  func.func @transform_2(%arg0: i32) -> (i32, i32, i32) {
    %c0_i32 = arith.constant 0 : i32
    %c0_i32_0 = arith.constant 0 : i32
    %c0_i32_1 = arith.constant 0 : i32
    %c0_i32_2 = arith.constant 0 : i32
    return %c0_i32, %c0_i32_0, %c0_i32_1 : i32, i32, i32
  }
  func.func @transform_3(%arg0: i32) -> (i32, i32) {
    %c0_i32 = arith.constant 0 : i32
    %c0_i32_0 = arith.constant 0 : i32
    %c0_i32_1 = arith.constant 0 : i32
    return %c0_i32, %c0_i32_0 : i32, i32
  }
  func.func @transform_4(%arg0: i32) -> (i32, i32) {
    %c0_i32 = arith.constant 0 : i32
    %c0_i32_0 = arith.constant 0 : i32
    %c0_i32_1 = arith.constant 0 : i32
    return %c0_i32, %c0_i32_0 : i32, i32
  }
  func.func @transform_5(%arg0: i32) -> (i32, i32, i32) {
    %c0_i32 = arith.constant 0 : i32
    %c0_i32_0 = arith.constant 0 : i32
    %c0_i32_1 = arith.constant 0 : i32
    return %arg0, %c0_i32, %c0_i32_0 : i32, i32, i32
  }
}

</mosaic_0001>

<llo_original>
// kernel: encoder_subtrack_d_forward.1
$region0: #{encoder_subtrack_d_forward.1}
  #allocation0 [shape = 'u32[]', space=smem, size = 0x4, offset = 0x4, fixed_abs, tag = 'smem constant byte address 0x4 - core index']
  #allocation1 [shape = 'u32[72,128]{1,0:T(1,128)}', space=vmem, size = 0x9000, scoped, tag = 'internal scratch']
  #allocation2 [shape = 'f32[512,128]{1,0:T(8,128)}', space=vmem, size = 0x40000, scoped, tag = 'scratch operand']
  %s0 = inlined_call_operand.vmem [shape: f32[2,512,1], index: 0, kind: input, shape index: {}]
  %s1 = inlined_call_operand.vmem [shape: f32[1,128], index: 1, kind: input, shape index: {}]
  %s2 = inlined_call_operand.vmem [shape: bf16[3,128,128], index: 2, kind: input, shape index: {}]
  %s3 = inlined_call_operand.vmem [shape: f32[4,128], index: 3, kind: input, shape index: {}]
  %s4 = inlined_call_operand.vmem [shape: f32[4,128], index: 4, kind: input, shape index: {}]
  %s5 = inlined_call_operand.vmem [shape: f32[2,512,32], index: 5, kind: output, shape index: {}]
  %s6 = sld [smem:[#allocation0]]
  $region88: #{encoder_subtrack_d_forward.1} parent=0
    _
  %s8 = ssub.s32 1, %s6
  %s9 = scalar_select 0, %s8, %s6
  loop: start=0, step=1, limit=4
  $region2: #{encoder_subtrack_d_forward.1} parent=0 // loop_pre_header
    _
  $region3: #{encoder_subtrack_d_forward.1} parent=0 // loop_header
    %s11 = sphi 0, %s15
    %p12 = scmp.ge.s32.totalorder %s11, 4
    %s21 = sphi 0, %s23
    %s24 = sphi 0, %s21
    %s25 = sphi 0, %s24
    %s41 = sphi 0, %s25
    %s45 = sphi 0, %s45
    %s47 = sphi 0, %s45
    %s48 = sphi 0, %s47
    %s62 = sphi 0, %s48
    %s66 = sphi 0, %s66
    %s68 = sphi 0, %s66
    %s69 = sphi 0, %s68
    %s83 = sphi 0, %s69
    %s87 = sphi 0, %s87
    %s89 = sphi 0, %s87
    %s90 = sphi 0, %s89
    %s104 = sphi 0, %s90
    %s108 = sphi 0, %s108
    %s110 = sphi 0, %s108
    %s111 = sphi 0, %s110
    %s125 = sphi 0, %s111
    %s131 = sphi 0, %s133
    %s134 = sphi 0, %s131
    %s135 = sphi 0, %s134
    %s151 = sphi 0, %s135
  $region4: #{encoder_subtrack_d_forward.1} parent=0 // loop_header_branch
    %14 = sbr.rel (%p12) target = $region8
  $region5: #{encoder_subtrack_d_forward.1} parent=0 // loop_body
    %s16 = ssub.s32 %s11, 1
    %s17 = ssub.s32 %s11, 2
    %s18 = sadd.s32 %s11, 1
    %s19 = ssub.s32 %s11, %s18
    %p20 = scmp.eq.s32.totalorder %s19, 0
    %s22 = sadd.s32 %s21, 1
    %s23 = scalar_select %p20, %s21, %s22
    %p26 = pneg %p20
    %p27 = scmp.eq.s32.totalorder %s11, 1
    %p28 = por %p26, %p27
    %p29 = scmp.ne.s32.totalorder %s21, %s24
    %p30 = scmp.eq.s32.totalorder %s11, 0
    %p31 = por %p29, %p30
    %p32 = scmp.ne.s32.totalorder %s21, %s24
    %p33 = scmp.eq.s32.totalorder %s16, 1
    %p34 = por %p32, %p33
    %p35 = scmp.ne.s32.totalorder %s24, %s25
    %p36 = scmp.eq.s32.totalorder %s16, 0
    %p37 = por %p35, %p36
    %p38 = scmp.ne.s32.totalorder %s24, %s25
    %p39 = scmp.eq.s32.totalorder %s17, 1
    %p40 = por %p38, %p39
    %p42 = scmp.ne.s32.totalorder %s25, %s41
    %p43 = scmp.eq.s32.totalorder %s17, 0
    %p44 = por %p42, %p43
    %s46 = sadd.s32 %s45, 1
    %p49 = scmp.eq.s32.totalorder %s11, 1
    %p50 = scmp.ne.s32.totalorder %s45, %s47
    %p51 = scmp.eq.s32.totalorder %s11, 0
    %p52 = por %p50, %p51
    %p53 = scmp.ne.s32.totalorder %s45, %s47
    %p54 = scmp.eq.s32.totalorder %s16, 1
    %p55 = por %p53, %p54
    %p56 = scmp.ne.s32.totalorder %s47, %s48
    %p57 = scmp.eq.s32.totalorder %s16, 0
    %p58 = por %p56, %p57
    %p59 = scmp.ne.s32.totalorder %s47, %s48
    %p60 = scmp.eq.s32.totalorder %s17, 1
    %p61 = por %p59, %p60
    %p63 = scmp.ne.s32.totalorder %s48, %s62
    %p64 = scmp.eq.s32.totalorder %s17, 0
    %p65 = por %p63, %p64
    %s67 = sadd.s32 %s66, 1
    %p70 = scmp.eq.s32.totalorder %s11, 1
    %p71 = scmp.ne.s32.totalorder %s66, %s68
    %p72 = scmp.eq.s32.totalorder %s11, 0
    %p73 = por %p71, %p72
    %p74 = scmp.ne.s32.totalorder %s66, %s68
    %p75 = scmp.eq.s32.totalorder %s16, 1
    %p76 = por %p74, %p75
    %p77 = scmp.ne.s32.totalorder %s68, %s69
    %p78 = scmp.eq.s32.totalorder %s16, 0
    %p79 = por %p77, %p78
    %p80 = scmp.ne.s32.totalorder %s68, %s69
    %p81 = scmp.eq.s32.totalorder %s17, 1
    %p82 = por %p80, %p81
    %p84 = scmp.ne.s32.totalorder %s69, %s83
    %p85 = scmp.eq.s32.totalorder %s17, 0
    %p86 = por %p84, %p85
    %s88 = sadd.s32 %s87, 1
    %p91 = scmp.eq.s32.totalorder %s11, 1
    %p92 = scmp.ne.s32.totalorder %s87, %s89
    %p93 = scmp.eq.s32.totalorder %s11, 0
    %p94 = por %p92, %p93
    %p95 = scmp.ne.s32.totalorder %s87, %s89
    %p96 = scmp.eq.s32.totalorder %s16, 1
    %p97 = por %p95, %p96
    %p98 = scmp.ne.s32.totalorder %s89, %s90
    %p99 = scmp.eq.s32.totalorder %s16, 0
    %p100 = por %p98, %p99
    %p101 = scmp.ne.s32.totalorder %s89, %s90
    %p102 = scmp.eq.s32.totalorder %s17, 1
    %p103 = por %p101, %p102
    %p105 = scmp.ne.s32.totalorder %s90, %s104
    %p106 = scmp.eq.s32.totalorder %s17, 0
    %p107 = por %p105, %p106
    %s109 = sadd.s32 %s108, 1
    %p112 = scmp.eq.s32.totalorder %s11, 1
    %p113 = scmp.ne.s32.totalorder %s108, %s110
    %p114 = scmp.eq.s32.totalorder %s11, 0
    %p115 = por %p113, %p114
    %p116 = scmp.ne.s32.totalorder %s108, %s110
    %p117 = scmp.eq.s32.totalorder %s16, 1
    %p118 = por %p116, %p117
    %p119 = scmp.ne.s32.totalorder %s110, %s111
    %p120 = scmp.eq.s32.totalorder %s16, 0
    %p121 = por %p119, %p120
    %p122 = scmp.ne.s32.totalorder %s110, %s111
    %p123 = scmp.eq.s32.totalorder %s17, 1
    %p124 = por %p122, %p123
    %p126 = scmp.ne.s32.totalorder %s111, %s125
    %p127 = scmp.eq.s32.totalorder %s17, 0
    %p128 = por %p126, %p127
    %s129 = ssub.s32 %s11, %s18
    %p130 = scmp.eq.s32.totalorder %s129, 0
    %s132 = sadd.s32 %s131, 1
    %s133 = scalar_select %p130, %s131, %s132
    %p136 = pneg %p130
    %p137 = scmp.eq.s32.totalorder %s11, 1
    %p138 = por %p136, %p137
    %p139 = scmp.ne.s32.totalorder %s131, %s134
    %p140 = scmp.eq.s32.totalorder %s11, 0
    %p141 = por %p139, %p140
    %p142 = scmp.ne.s32.totalorder %s131, %s134
    %p143 = scmp.eq.s32.totalorder %s16, 1
    %p144 = por %p142, %p143
    %p145 = scmp.ne.s32.totalorder %s134, %s135
    %p146 = scmp.eq.s32.totalorder %s16, 0
    %p147 = por %p145, %p146
    %p148 = scmp.ne.s32.totalorder %s134, %s135
    %p149 = scmp.eq.s32.totalorder %s17, 1
    %p150 = por %p148, %p149
    %p152 = scmp.ne.s32.totalorder %s135, %s151
    %p153 = scmp.eq.s32.totalorder %s17, 0
    %p154 = por %p152, %p153
    %p155 = scmp.le.s32.totalorder 1, %s11
    %p156 = scmp.lt.s32.totalorder %s11, 3
    %p157 = pnand %p155, %p156
    %p158 = pneg %p157
    // Predicated region
    $region9: #{encoder_subtrack_d_forward.1} parent=5 // pred_check
      _
    $region10: #{encoder_subtrack_d_forward.1} parent=5 // pred_check_branch
      %160 = sbr.rel (%p157) target = $region12
    $region11: #{encoder_subtrack_d_forward.1} parent=5 // pred_region
      %s161 = ssub.s32 %s11, 1
      // Predicated region
      $region13: #{encoder_subtrack_d_forward.1} parent=11 // pred_check
        %p162 = pneg %p58
      $region14: #{encoder_subtrack_d_forward.1} parent=11 // pred_check_branch
        %164 = sbr.rel (%p162) target = $region16
      $region15: #{encoder_subtrack_d_forward.1} parent=11 // pred_region
        _
      $region16: #{encoder_subtrack_d_forward.1} parent=11 // pred_fallthru
        _
      // Predicated region
      $region17: #{encoder_subtrack_d_forward.1} parent=11 // pred_check
        %p165 = pneg %p79
      $region18: #{encoder_subtrack_d_forward.1} parent=11 // pred_check_branch
        %167 = sbr.rel (%p165) target = $region20
      $region19: #{encoder_subtrack_d_forward.1} parent=11 // pred_region
        _
      $region20: #{encoder_subtrack_d_forward.1} parent=11 // pred_fallthru
        _
      // Predicated region
      $region21: #{encoder_subtrack_d_forward.1} parent=11 // pred_check
        %p168 = pneg %p100
      $region22: #{encoder_subtrack_d_forward.1} parent=11 // pred_check_branch
        %170 = sbr.rel (%p168) target = $region24
      $region23: #{encoder_subtrack_d_forward.1} parent=11 // pred_region
        _
      $region24: #{encoder_subtrack_d_forward.1} parent=11 // pred_fallthru
        _
      // Predicated region
      $region25: #{encoder_subtrack_d_forward.1} parent=11 // pred_check
        %p171 = pneg %p121
      $region26: #{encoder_subtrack_d_forward.1} parent=11 // pred_check_branch
        %173 = sbr.rel (%p171) target = $region28
      $region27: #{encoder_subtrack_d_forward.1} parent=11 // pred_region
        _
      $region28: #{encoder_subtrack_d_forward.1} parent=11 // pred_fallthru
        _
    $region12: #{encoder_subtrack_d_forward.1} parent=5 // pred_fallthru
      _
    %p174 = scmp.lt.s32.totalorder %s11, 2
    // Predicated region
    $region29: #{encoder_subtrack_d_forward.1} parent=5 // pred_check
      %p175 = pneg %p174
    $region30: #{encoder_subtrack_d_forward.1} parent=5 // pred_check_branch
      %177 = sbr.rel (%p175) target = $region32
    $region31: #{encoder_subtrack_d_forward.1} parent=5 // pred_region
      // Predicated region
      $region33: #{encoder_subtrack_d_forward.1} parent=31 // pred_check
        %p178 = pneg %p31
      $region34: #{encoder_subtrack_d_forward.1} parent=31 // pred_check_branch
        %180 = sbr.rel (%p178) target = $region36
      $region35: #{encoder_subtrack_d_forward.1} parent=31 // pred_region
        %p181 = scmp.lt.s32.totalorder %s11, 1
        %s182 = scalar_select %p181, %s11, 1
        %s183 = smul.addr %s182, 64
        %s184 = smul.addr %s183, 8
        %s185 = scalar_lea.vmem %s0, %s184
      $region36: #{encoder_subtrack_d_forward.1} parent=31 // pred_fallthru
        _
    $region32: #{encoder_subtrack_d_forward.1} parent=5 // pred_fallthru
      _
    %p186 = scmp.le.s32.totalorder 1, %s11
    %p187 = scmp.lt.s32.totalorder %s11, 3
    %p188 = pnand %p186, %p187
    %p189 = pneg %p188
    // Predicated region
    $region37: #{encoder_subtrack_d_forward.1} parent=5 // pred_check
      _
    $region38: #{encoder_subtrack_d_forward.1} parent=5 // pred_check_branch
      %191 = sbr.rel (%p188) target = $region40
    $region39: #{encoder_subtrack_d_forward.1} parent=5 // pred_region
      %s192 = ssub.s32 %s11, 1
      %p193 = scmp.lt.s32.totalorder %s16, 1
      %s194 = scalar_select %p193, %s16, 1
      %s195 = smul.addr %s194, 64
      %s196 = smul.addr %s195, 8
      %s197 = scalar_lea.vmem %s0, %s196
      %p198 = pneg %p37
      %p199 = pneg %p34
      %p200 = pneg %p58
      %p201 = pneg %p55
      %p202 = pneg %p79
      %p203 = pneg %p76
      %p204 = pneg %p100
      %p205 = pneg %p97
      %p206 = pneg %p121
      %p207 = pneg %p118
      %p208 = pneg %p147
      %p209 = pneg %p144
      %p210 = scmp.lt.s32.totalorder %s16, 1
      %s211 = scalar_select %p210, %s16, 1
      %s212 = smul.addr %s211, 64
      %s213 = smul.addr %s212, 8
      %s214 = scalar_lea.vmem %s5, %s213
      %p215 = scmp.lt.s32.totalorder %s16, 1
      %s216 = scalar_select %p215, %s16, 1
      %s217 = smul.addr %s216, 64
      %s218 = smul.addr %s217, 8
      %s219 = scalar_lea.vmem %s0, %s218
      %p220 = scmp.lt.s32.totalorder %s16, 1
      %s221 = scalar_select %p220, %s16, 1
      %s222 = smul.addr %s221, 64
      %s223 = smul.addr %s222, 8
      %s224 = scalar_lea.vmem %s5, %s223
      %v225 = vlaneseq
      %v226 = vshrl.u32 %v225, 7
      %v227 = vadd.s32 %v226, 8
      %v228 = vadd.s32 %v226, 16
      %v229 = vadd.s32 %v226, 24
      %v230 = vadd.s32 %v226, 32
      %v231 = vadd.s32 %v226, 40
      %v232 = vadd.s32 %v226, 48
      %v233 = vadd.s32 %v226, 56
      %v234 = vadd.s32 %v226, 64
      %v235 = vadd.s32 %v226, 72
      %v236 = vadd.s32 %v226, 80
      %v237 = vadd.s32 %v226, 88
      %v238 = vadd.s32 %v226, 96
      %v239 = vadd.s32 %v226, 104
      %v240 = vadd.s32 %v226, 112
      %v241 = vadd.s32 %v226, 120
      %vm242 = vcmp.lt.s32.totalorder %v226, 96
      %vm243 = vcmp.lt.s32.totalorder %v227, 96
      %vm244 = vcmp.lt.s32.totalorder %v228, 96
      %vm245 = vcmp.lt.s32.totalorder %v229, 96
      %vm246 = vcmp.lt.s32.totalorder %v230, 96
      %vm247 = vcmp.lt.s32.totalorder %v231, 96
      %vm248 = vcmp.lt.s32.totalorder %v232, 96
      %vm249 = vcmp.lt.s32.totalorder %v233, 96
      %vm250 = vcmp.lt.s32.totalorder %v234, 96
      %vm251 = vcmp.lt.s32.totalorder %v235, 96
      %vm252 = vcmp.lt.s32.totalorder %v236, 96
      %vm253 = vcmp.lt.s32.totalorder %v237, 96
      %vm254 = vcmp.lt.s32.totalorder %v238, 96
      %vm255 = vcmp.lt.s32.totalorder %v239, 96
      %vm256 = vcmp.lt.s32.totalorder %v240, 96
      %vm257 = vcmp.lt.s32.totalorder %v241, 96
      %v258 = vsel %vm242, 1, 0
      %v259 = vsel %vm243, 1, 0
      %v260 = vsel %vm244, 1, 0
      %v261 = vsel %vm245, 1, 0
      %v262 = vsel %vm246, 1, 0
      %v263 = vsel %vm247, 1, 0
      %v264 = vsel %vm248, 1, 0
      %v265 = vsel %vm249, 1, 0
      %v266 = vsel %vm250, 1, 0
      %v267 = vsel %vm251, 1, 0
      %v268 = vsel %vm252, 1, 0
      %v269 = vsel %vm253, 1, 0
      %v270 = vsel %vm254, 1, 0
      %v271 = vsel %vm255, 1, 0
      %v272 = vsel %vm256, 1, 0
      %v273 = vsel %vm257, 1, 0
      %v274 = vcvt.s32.f32 %v258
      %v275 = vcvt.s32.f32 %v259
      %v276 = vcvt.s32.f32 %v260
      %v277 = vcvt.s32.f32 %v261
      %v278 = vcvt.s32.f32 %v262
      %v279 = vcvt.s32.f32 %v263
      %v280 = vcvt.s32.f32 %v264
      %v281 = vcvt.s32.f32 %v265
      %v282 = vcvt.s32.f32 %v266
      %v283 = vcvt.s32.f32 %v267
      %v284 = vcvt.s32.f32 %v268
      %v285 = vcvt.s32.f32 %v269
      %v286 = vcvt.s32.f32 %v270
      %v287 = vcvt.s32.f32 %v271
      %v288 = vcvt.s32.f32 %v272
      %v289 = vcvt.s32.f32 %v273
      %v290 = vld [vmem:[%s1] sm:$0x1]
      loop: start=0, step=1, limit=4
      $region41: #{encoder_subtrack_d_forward.1} parent=39 // loop_pre_header
        _
      $region42: #{encoder_subtrack_d_forward.1} parent=39 // loop_header
        %s292 = sphi 0, %s296
        %p293 = scmp.ge.s32.totalorder %s292, 4
        %v297 = vphi 0.0, %v454
        %v298 = vphi 0.0, %v492
      $region43: #{encoder_subtrack_d_forward.1} parent=39 // loop_header_branch
        %295 = sbr.rel (%p293) target = $region47
      $region44: #{encoder_subtrack_d_forward.1} parent=39 // loop_body
        %s299 = smul.u32 %s292, 128
        %s300 = scalar_lea.vmem %s219, %s299
        %v301 = vld [vmem:[%s300] sm:$0xff]
        %v302 = vld [vmem:[%s300 + $0x8] sm:$0xff]
        %v303 = vld [vmem:[%s300 + $0x10] sm:$0xff]
        %v304 = vld [vmem:[%s300 + $0x18] sm:$0xff]
        %v305 = vld [vmem:[%s300 + $0x20] sm:$0xff]
        %v306 = vld [vmem:[%s300 + $0x28] sm:$0xff]
        %v307 = vld [vmem:[%s300 + $0x30] sm:$0xff]
        %v308 = vld [vmem:[%s300 + $0x38] sm:$0xff]
        %v309 = vld [vmem:[%s300 + $0x40] sm:$0xff]
        %v310 = vld [vmem:[%s300 + $0x48] sm:$0xff]
        %v311 = vld [vmem:[%s300 + $0x50] sm:$0xff]
        %v312 = vld [vmem:[%s300 + $0x58] sm:$0xff]
        %v313 = vld [vmem:[%s300 + $0x60] sm:$0xff]
        %v314 = vld [vmem:[%s300 + $0x68] sm:$0xff]
        %v315 = vld [vmem:[%s300 + $0x70] sm:$0xff]
        %v316 = vld [vmem:[%s300 + $0x78] sm:$0xff]
        %318 = vset.pattern.permute.xlu0 0
        %319 = vperm.xlu0 %318, %v301
        %v320 = vpop.permute.xlu0 %319
        %323 = vset.pattern.permute.xlu0 0
        %324 = vperm.xlu0 %323, %v302
        %v325 = vpop.permute.xlu0 %324
        %328 = vset.pattern.permute.xlu0 0
        %329 = vperm.xlu0 %328, %v303
        %v330 = vpop.permute.xlu0 %329
        %333 = vset.pattern.permute.xlu0 0
        %334 = vperm.xlu0 %333, %v304
        %v335 = vpop.permute.xlu0 %334
        %338 = vset.pattern.permute.xlu0 0
        %339 = vperm.xlu0 %338, %v305
        %v340 = vpop.permute.xlu0 %339
        %343 = vset.pattern.permute.xlu0 0
        %344 = vperm.xlu0 %343, %v306
        %v345 = vpop.permute.xlu0 %344
        %348 = vset.pattern.permute.xlu0 0
        %349 = vperm.xlu0 %348, %v307
        %v350 = vpop.permute.xlu0 %349
        %353 = vset.pattern.permute.xlu0 0
        %354 = vperm.xlu0 %353, %v308
        %v355 = vpop.permute.xlu0 %354
        %358 = vset.pattern.permute.xlu0 0
        %359 = vperm.xlu0 %358, %v309
        %v360 = vpop.permute.xlu0 %359
        %363 = vset.pattern.permute.xlu0 0
        %364 = vperm.xlu0 %363, %v310
        %v365 = vpop.permute.xlu0 %364
        %368 = vset.pattern.permute.xlu0 0
        %369 = vperm.xlu0 %368, %v311
        %v370 = vpop.permute.xlu0 %369
        %373 = vset.pattern.permute.xlu0 0
        %374 = vperm.xlu0 %373, %v312
        %v375 = vpop.permute.xlu0 %374
        %378 = vset.pattern.permute.xlu0 0
        %379 = vperm.xlu0 %378, %v313
        %v380 = vpop.permute.xlu0 %379
        %383 = vset.pattern.permute.xlu0 0
        %384 = vperm.xlu0 %383, %v314
        %v385 = vpop.permute.xlu0 %384
        %388 = vset.pattern.permute.xlu0 0
        %389 = vperm.xlu0 %388, %v315
        %v390 = vpop.permute.xlu0 %389
        %393 = vset.pattern.permute.xlu0 0
        %394 = vperm.xlu0 %393, %v316
        %v395 = vpop.permute.xlu0 %394
        %v398 = vperm.slane %v290, 0
        %v400 = vmul.f32 %v320, %v398
        %v401 = vmul.f32 %v325, %v398
        %v402 = vmul.f32 %v330, %v398
        %v403 = vmul.f32 %v335, %v398
        %v404 = vmul.f32 %v340, %v398
        %v405 = vmul.f32 %v345, %v398
        %v406 = vmul.f32 %v350, %v398
        %v407 = vmul.f32 %v355, %v398
        %v408 = vmul.f32 %v360, %v398
        %v409 = vmul.f32 %v365, %v398
        %v410 = vmul.f32 %v370, %v398
        %v411 = vmul.f32 %v375, %v398
        %v412 = vmul.f32 %v380, %v398
        %v413 = vmul.f32 %v385, %v398
        %v414 = vmul.f32 %v390, %v398
        %v415 = vmul.f32 %v395, %v398
        %s416 = scalar_lea.vmem [#allocation2], %s299
        %417 = vst [vmem:[%s416] sm:$0xff] %v400
        %418 = vst [vmem:[%s416 + $0x8] sm:$0xff] %v401
        %419 = vst [vmem:[%s416 + $0x10] sm:$0xff] %v402
        %420 = vst [vmem:[%s416 + $0x18] sm:$0xff] %v403
        %421 = vst [vmem:[%s416 + $0x20] sm:$0xff] %v404
        %422 = vst [vmem:[%s416 + $0x28] sm:$0xff] %v405
        %423 = vst [vmem:[%s416 + $0x30] sm:$0xff] %v406
        %424 = vst [vmem:[%s416 + $0x38] sm:$0xff] %v407
        %425 = vst [vmem:[%s416 + $0x40] sm:$0xff] %v408
        %426 = vst [vmem:[%s416 + $0x48] sm:$0xff] %v409
        %427 = vst [vmem:[%s416 + $0x50] sm:$0xff] %v410
        %428 = vst [vmem:[%s416 + $0x58] sm:$0xff] %v411
        %429 = vst [vmem:[%s416 + $0x60] sm:$0xff] %v412
        %430 = vst [vmem:[%s416 + $0x68] sm:$0xff] %v413
        %431 = vst [vmem:[%s416 + $0x70] sm:$0xff] %v414
        %432 = vst [vmem:[%s416 + $0x78] sm:$0xff] %v415
        %v433 = vadd.f32 %v400, %v401
        %v434 = vadd.f32 %v433, %v402
        %v435 = vadd.f32 %v434, %v403
        %v436 = vadd.f32 %v435, %v404
        %v437 = vadd.f32 %v436, %v405
        %v438 = vadd.f32 %v437, %v406
        %v439 = vadd.f32 %v438, %v407
        %v440 = vadd.f32 %v439, %v408
        %v441 = vadd.f32 %v440, %v409
        %v442 = vadd.f32 %v441, %v410
        %v443 = vadd.f32 %v442, %v411
        %v444 = vadd.f32 %v443, %v412
        %v445 = vadd.f32 %v444, %v413
        %v446 = vadd.f32 %v445, %v414
        %v447 = vadd.f32 %v446, %v415
        %v448 = vrot.slane %v447, 4
        %v449 = vadd.f32 %v447, %v448
        %v450 = vrot.slane %v449, 2
        %v451 = vadd.f32 %v449, %v450
        %v452 = vrot.slane %v451, 1
        %v453 = vadd.f32 %v451, %v452
        %v454 = vadd.f32 %v297, %v453
        %v455 = vmul.f32 %v400, %v400
        %v456 = vmul.f32 %v401, %v401
        %v457 = vmul.f32 %v402, %v402
        %v458 = vmul.f32 %v403, %v403
        %v459 = vmul.f32 %v404, %v404
        %v460 = vmul.f32 %v405, %v405
        %v461 = vmul.f32 %v406, %v406
        %v462 = vmul.f32 %v407, %v407
        %v463 = vmul.f32 %v408, %v408
        %v464 = vmul.f32 %v409, %v409
        %v465 = vmul.f32 %v410, %v410
        %v466 = vmul.f32 %v411, %v411
        %v467 = vmul.f32 %v412, %v412
        %v468 = vmul.f32 %v413, %v413
        %v469 = vmul.f32 %v414, %v414
        %v470 = vmul.f32 %v415, %v415
        %v471 = vadd.f32 %v455, %v456
        %v472 = vadd.f32 %v471, %v457
        %v473 = vadd.f32 %v472, %v458
        %v474 = vadd.f32 %v473, %v459
        %v475 = vadd.f32 %v474, %v460
        %v476 = vadd.f32 %v475, %v461
        %v477 = vadd.f32 %v476, %v462
        %v478 = vadd.f32 %v477, %v463
        %v479 = vadd.f32 %v478, %v464
        %v480 = vadd.f32 %v479, %v465
        %v481 = vadd.f32 %v480, %v466
        %v482 = vadd.f32 %v481, %v467
        %v483 = vadd.f32 %v482, %v468
        %v484 = vadd.f32 %v483, %v469
        %v485 = vadd.f32 %v484, %v470
        %v486 = vrot.slane %v485, 4
        %v487 = vadd.f32 %v485, %v486
        %v488 = vrot.slane %v487, 2
        %v489 = vadd.f32 %v487, %v488
        %v490 = vrot.slane %v489, 1
        %v491 = vadd.f32 %v489, %v490
        %v492 = vadd.f32 %v298, %v491
      $region45: #{encoder_subtrack_d_forward.1} parent=39 // loop_footer
        %s296 = sadd.s32 1, %s292
      $region46: #{encoder_subtrack_d_forward.1} parent=39 // loop_footer_branch
        %291 = sbr.rel target = $region42
      $region47: #{encoder_subtrack_d_forward.1} parent=39 // loop_exit
        _
      %v493 = vld [vmem:[%s3] sm:$0x1]
      %v494 = vld [vmem:[%s4] sm:$0x1]
      %v495 = vmul.f32 %v297, 0.0020833334
      %v496 = vmul.f32 %v298, 0.0020833334
      %v497 = vmul.f32 %v495, %v495
      %v498 = vsub.f32 %v496, %v497
      %v499 = vmax.f32 %v498, 0.0
      %v500 = vadd.f32 %v499, 1e-05
      %v501 = vrsqrt.pop %v500
      %v502 = vmul.f32 %v501, %v500
      %v503 = vmul.f32 %v502, %v501
      %v504 = vmul.f32 0.5, %v503
      %v505 = vsub.f32 1.5, %v504
      %v506 = vmul.f32 %v501, %v505
      %vm507 = vweird.f32 %v500
      %vm508 = vweird.f32 %v501
      %vm509 = vmor %vm507, %vm508
      %v510 = vsel %vm509, %v501, %v506
      %v511 = vmul.f32 %v493, %v510
      %v512 = vmul.f32 %v495, %v511
      %v513 = vsub.f32 %v494, %v512
      %v514 = vld [vmem:[%s2] sm:$0xf]
      %v515 = vld [vmem:[%s2 + $0x4] sm:$0xf]
      %v516 = vld [vmem:[%s2 + $0x8] sm:$0xf]
      %v517 = vld [vmem:[%s2 + $0xc] sm:$0xf]
      %v518 = vld [vmem:[%s2 + $0x10] sm:$0xf]
      %v519 = vld [vmem:[%s2 + $0x14] sm:$0xf]
      %v520 = vld [vmem:[%s2 + $0x18] sm:$0xf]
      %v521 = vld [vmem:[%s2 + $0x1c] sm:$0xf]
      %v522 = vld [vmem:[%s2 + $0x20] sm:$0xf]
      %v523 = vld [vmem:[%s2 + $0x24] sm:$0xf]
      %v524 = vld [vmem:[%s2 + $0x28] sm:$0xf]
      %v525 = vld [vmem:[%s2 + $0x2c] sm:$0xf]
      %v526 = vld [vmem:[%s2 + $0x30] sm:$0xf]
      %v527 = vld [vmem:[%s2 + $0x34] sm:$0xf]
      %v528 = vld [vmem:[%s2 + $0x38] sm:$0xf]
      %v529 = vld [vmem:[%s2 + $0x3c] sm:$0xf]
      loop: start=0, step=1, limit=3
      $region48: #{encoder_subtrack_d_forward.1} parent=39 // loop_pre_header
        _
      $region49: #{encoder_subtrack_d_forward.1} parent=39 // loop_header
        %s531 = sphi 0, %s535
        %p532 = scmp.ge.s32.totalorder %s531, 3
        %v536 = vphi 0.0, %v748
        %v537 = vphi 0.0, %v786
      $region50: #{encoder_subtrack_d_forward.1} parent=39 // loop_header_branch
        %534 = sbr.rel (%p532) target = $region54
      $region51: #{encoder_subtrack_d_forward.1} parent=39 // loop_body
        %s538 = smul.u32 %s531, 128
        %s539 = scalar_lea.vmem [#allocation2], %s538
        %v540 = vld [vmem:[%s539] sm:$0xff]
        %v541 = vld [vmem:[%s539 + $0x8] sm:$0xff]
        %v542 = vld [vmem:[%s539 + $0x10] sm:$0xff]
        %v543 = vld [vmem:[%s539 + $0x18] sm:$0xff]
        %v544 = vld [vmem:[%s539 + $0x20] sm:$0xff]
        %v545 = vld [vmem:[%s539 + $0x28] sm:$0xff]
        %v546 = vld [vmem:[%s539 + $0x30] sm:$0xff]
        %v547 = vld [vmem:[%s539 + $0x38] sm:$0xff]
        %v548 = vld [vmem:[%s539 + $0x40] sm:$0xff]
        %v549 = vld [vmem:[%s539 + $0x48] sm:$0xff]
        %v550 = vld [vmem:[%s539 + $0x50] sm:$0xff]
        %v551 = vld [vmem:[%s539 + $0x58] sm:$0xff]
        %v552 = vld [vmem:[%s539 + $0x60] sm:$0xff]
        %v553 = vld [vmem:[%s539 + $0x68] sm:$0xff]
        %v554 = vld [vmem:[%s539 + $0x70] sm:$0xff]
        %v555 = vld [vmem:[%s539 + $0x78] sm:$0xff]
        %v556 = vperm.slane %v511, 0
        %v557 = vmul.f32 %v540, %v556
        %v558 = vmul.f32 %v541, %v556
        %v559 = vmul.f32 %v542, %v556
        %v560 = vmul.f32 %v543, %v556
        %v561 = vmul.f32 %v544, %v556
        %v562 = vmul.f32 %v545, %v556
        %v563 = vmul.f32 %v546, %v556
        %v564 = vmul.f32 %v547, %v556
        %v565 = vmul.f32 %v548, %v556
        %v566 = vmul.f32 %v549, %v556
        %v567 = vmul.f32 %v550, %v556
        %v568 = vmul.f32 %v551, %v556
        %v569 = vmul.f32 %v552, %v556
        %v570 = vmul.f32 %v553, %v556
        %v571 = vmul.f32 %v554, %v556
        %v572 = vmul.f32 %v555, %v556
        %v573 = vperm.slane %v513, 0
        %v574 = vadd.f32 %v557, %v573
        %v575 = vadd.f32 %v558, %v573
        %v576 = vadd.f32 %v559, %v573
        %v577 = vadd.f32 %v560, %v573
        %v578 = vadd.f32 %v561, %v573
        %v579 = vadd.f32 %v562, %v573
        %v580 = vadd.f32 %v563, %v573
        %v581 = vadd.f32 %v564, %v573
        %v582 = vadd.f32 %v565, %v573
        %v583 = vadd.f32 %v566, %v573
        %v584 = vadd.f32 %v567, %v573
        %v585 = vadd.f32 %v568, %v573
        %v586 = vadd.f32 %v569, %v573
        %v587 = vadd.f32 %v570, %v573
        %v588 = vadd.f32 %v571, %v573
        %v589 = vadd.f32 %v572, %v573
        %v590 = vmax.f32 %v574, 0.0
        %v591 = vmax.f32 %v575, 0.0
        %v592 = vmax.f32 %v576, 0.0
        %v593 = vmax.f32 %v577, 0.0
        %v594 = vmax.f32 %v578, 0.0
        %v595 = vmax.f32 %v579, 0.0
        %v596 = vmax.f32 %v580, 0.0
        %v597 = vmax.f32 %v581, 0.0
        %v598 = vmax.f32 %v582, 0.0
        %v599 = vmax.f32 %v583, 0.0
        %v600 = vmax.f32 %v584, 0.0
        %v601 = vmax.f32 %v585, 0.0
        %v602 = vmax.f32 %v586, 0.0
        %v603 = vmax.f32 %v587, 0.0
        %v604 = vmax.f32 %v588, 0.0
        %v605 = vmax.f32 %v589, 0.0
        %v606 = vpack.c.bf16 %v591, %v590
        %v607 = vpack.c.bf16 %v593, %v592
        %v608 = vpack.c.bf16 %v595, %v594
        %v609 = vpack.c.bf16 %v597, %v596
        %v610 = vpack.c.bf16 %v599, %v598
        %v611 = vpack.c.bf16 %v601, %v600
        %v612 = vpack.c.bf16 %v603, %v602
        %v613 = vpack.c.bf16 %v605, %v604
        %v630 = vunpack.c.l.b16 %v514
        %v631 = vunpack.c.l.b16 %v515
        %v632 = vunpack.c.l.b16 %v516
        %v633 = vunpack.c.l.b16 %v517
        %v634 = vunpack.c.l.b16 %v518
        %v635 = vunpack.c.l.b16 %v519
        %v636 = vunpack.c.l.b16 %v520
        %v637 = vunpack.c.l.b16 %v521
        %v638 = vunpack.c.l.b16 %v522
        %v639 = vunpack.c.l.b16 %v523
        %v640 = vunpack.c.l.b16 %v524
        %v641 = vunpack.c.l.b16 %v525
        %v642 = vunpack.c.l.b16 %v526
        %v643 = vunpack.c.l.b16 %v527
        %v644 = vunpack.c.l.b16 %v528
        %v645 = vunpack.c.l.b16 %v529
        %v646 = vpack.c.b16 %v631, %v630
        %v647 = vpack.c.b16 %v633, %v632
        %v648 = vpack.c.b16 %v635, %v634
        %v649 = vpack.c.b16 %v637, %v636
        %v650 = vpack.c.b16 %v639, %v638
        %v651 = vpack.c.b16 %v641, %v640
        %v652 = vpack.c.b16 %v643, %v642
        %v653 = vpack.c.b16 %v645, %v644
        %662 = vmatpush.bf16.msra.mxu0 %v653
        %663 = vmatpush.bf16.msra.mxu0 %v652
        %664 = vmatpush.bf16.msra.mxu0 %v651
        %665 = vmatpush.bf16.msra.mxu0 %v650
        %666 = vmatpush.bf16.msra.mxu0 %v649
        %667 = vmatpush.bf16.msra.mxu0 %v648
        %668 = vmatpush.bf16.msra.mxu0 %v647
        %669 = vmatpush.bf16.msra.mxu0 %v646
        %670 = vmatmul.bf16.gmra.mxu0 %v606
        %v671 = vpop.f32.mrf.mxu0
        %v672 = vadd.f32 0.0, %v671
        %v673 = vpop.f32.mrf.mxu0
        %v674 = vadd.f32 0.0, %v673
        %675 = vmatmul.bf16.gmra.mxu0 %v607
        %v676 = vpop.f32.mrf.mxu0
        %v677 = vadd.f32 0.0, %v676
        %v678 = vpop.f32.mrf.mxu0
        %v679 = vadd.f32 0.0, %v678
        %680 = vmatmul.bf16.gmra.mxu0 %v608
        %v681 = vpop.f32.mrf.mxu0
        %v682 = vadd.f32 0.0, %v681
        %v683 = vpop.f32.mrf.mxu0
        %v684 = vadd.f32 0.0, %v683
        %685 = vmatmul.bf16.gmra.mxu0 %v609
        %v686 = vpop.f32.mrf.mxu0
        %v687 = vadd.f32 0.0, %v686
        %v688 = vpop.f32.mrf.mxu0
        %v689 = vadd.f32 0.0, %v688
        %690 = vmatmul.bf16.gmra.mxu0 %v610
        %v691 = vpop.f32.mrf.mxu0
        %v692 = vadd.f32 0.0, %v691
        %v693 = vpop.f32.mrf.mxu0
        %v694 = vadd.f32 0.0, %v693
        %695 = vmatmul.bf16.gmra.mxu0 %v611
        %v696 = vpop.f32.mrf.mxu0
        %v697 = vadd.f32 0.0, %v696
        %v698 = vpop.f32.mrf.mxu0
        %v699 = vadd.f32 0.0, %v698
        %700 = vmatmul.bf16.gmra.mxu0 %v612
        %v701 = vpop.f32.mrf.mxu0
        %v702 = vadd.f32 0.0, %v701
        %v703 = vpop.f32.mrf.mxu0
        %v704 = vadd.f32 0.0, %v703
        %705 = vmatmul.bf16.gmra.mxu0 %v613
        %v706 = vpop.f32.mrf.mxu0
        %v707 = vadd.f32 0.0, %v706
        %v708 = vpop.f32.mrf.mxu0
        %v709 = vadd.f32 0.0, %v708
        %710 = vdwg.mxu0
        %711 = vst [vmem:[%s539] sm:$0xff] %v672
        %712 = vst [vmem:[%s539 + $0x8] sm:$0xff] %v674
        %713 = vst [vmem:[%s539 + $0x10] sm:$0xff] %v677
        %714 = vst [vmem:[%s539 + $0x18] sm:$0xff] %v679
        %715 = vst [vmem:[%s539 + $0x20] sm:$0xff] %v682
        %716 = vst [vmem:[%s539 + $0x28] sm:$0xff] %v684
        %717 = vst [vmem:[%s539 + $0x30] sm:$0xff] %v687
        %718 = vst [vmem:[%s539 + $0x38] sm:$0xff] %v689
        %719 = vst [vmem:[%s539 + $0x40] sm:$0xff] %v692
        %720 = vst [vmem:[%s539 + $0x48] sm:$0xff] %v694
        %721 = vst [vmem:[%s539 + $0x50] sm:$0xff] %v697
        %722 = vst [vmem:[%s539 + $0x58] sm:$0xff] %v699
        %723 = vst [vmem:[%s539 + $0x60] sm:$0xff] %v702
        %724 = vst [vmem:[%s539 + $0x68] sm:$0xff] %v704
        %725 = vst [vmem:[%s539 + $0x70] sm:$0xff] %v707
        %726 = vst [vmem:[%s539 + $0x78] sm:$0xff] %v709
        %v727 = vadd.f32 %v672, %v674
        %v728 = vadd.f32 %v727, %v677
        %v729 = vadd.f32 %v728, %v679
        %v730 = vadd.f32 %v729, %v682
        %v731 = vadd.f32 %v730, %v684
        %v732 = vadd.f32 %v731, %v687
        %v733 = vadd.f32 %v732, %v689
        %v734 = vadd.f32 %v733, %v692
        %v735 = vadd.f32 %v734, %v694
        %v736 = vadd.f32 %v735, %v697
        %v737 = vadd.f32 %v736, %v699
        %v738 = vadd.f32 %v737, %v702
        %v739 = vadd.f32 %v738, %v704
        %v740 = vadd.f32 %v739, %v707
        %v741 = vadd.f32 %v740, %v709
        %v742 = vrot.slane %v741, 4
        %v743 = vadd.f32 %v741, %v742
        %v744 = vrot.slane %v743, 2
        %v745 = vadd.f32 %v743, %v744
        %v746 = vrot.slane %v745, 1
        %v747 = vadd.f32 %v745, %v746
        %v748 = vadd.f32 %v536, %v747
        %v749 = vmul.f32 %v672, %v672
        %v750 = vmul.f32 %v674, %v674
        %v751 = vmul.f32 %v677, %v677
        %v752 = vmul.f32 %v679, %v679
        %v753 = vmul.f32 %v682, %v682
        %v754 = vmul.f32 %v684, %v684
        %v755 = vmul.f32 %v687, %v687
        %v756 = vmul.f32 %v689, %v689
        %v757 = vmul.f32 %v692, %v692
        %v758 = vmul.f32 %v694, %v694
        %v759 = vmul.f32 %v697, %v697
        %v760 = vmul.f32 %v699, %v699
        %v761 = vmul.f32 %v702, %v702
        %v762 = vmul.f32 %v704, %v704
        %v763 = vmul.f32 %v707, %v707
        %v764 = vmul.f32 %v709, %v709
        %v765 = vadd.f32 %v749, %v750
        %v766 = vadd.f32 %v765, %v751
        %v767 = vadd.f32 %v766, %v752
        %v768 = vadd.f32 %v767, %v753
        %v769 = vadd.f32 %v768, %v754
        %v770 = vadd.f32 %v769, %v755
        %v771 = vadd.f32 %v770, %v756
        %v772 = vadd.f32 %v771, %v757
        %v773 = vadd.f32 %v772, %v758
        %v774 = vadd.f32 %v773, %v759
        %v775 = vadd.f32 %v774, %v760
        %v776 = vadd.f32 %v775, %v761
        %v777 = vadd.f32 %v776, %v762
        %v778 = vadd.f32 %v777, %v763
        %v779 = vadd.f32 %v778, %v764
        %v780 = vrot.slane %v779, 4
        %v781 = vadd.f32 %v779, %v780
        %v782 = vrot.slane %v781, 2
        %v783 = vadd.f32 %v781, %v782
        %v784 = vrot.slane %v783, 1
        %v785 = vadd.f32 %v783, %v784
        %v786 = vadd.f32 %v537, %v785
      $region52: #{encoder_subtrack_d_forward.1} parent=39 // loop_footer
        %s535 = sadd.s32 1, %s531
      $region53: #{encoder_subtrack_d_forward.1} parent=39 // loop_footer_branch
        %530 = sbr.rel target = $region49
      $region54: #{encoder_subtrack_d_forward.1} parent=39 // loop_exit
        _
      %v787 = vld [vmem:[#allocation2 + $0x180] sm:$0xff]
      %v788 = vld [vmem:[#allocation2 + $0x188] sm:$0xff]
      %v789 = vld [vmem:[#allocation2 + $0x190] sm:$0xff]
      %v790 = vld [vmem:[#allocation2 + $0x198] sm:$0xff]
      %v791 = vld [vmem:[#allocation2 + $0x1a0] sm:$0xff]
      %v792 = vld [vmem:[#allocation2 + $0x1a8] sm:$0xff]
      %v793 = vld [vmem:[#allocation2 + $0x1b0] sm:$0xff]
      %v794 = vld [vmem:[#allocation2 + $0x1b8] sm:$0xff]
      %v795 = vld [vmem:[#allocation2 + $0x1c0] sm:$0xff]
      %v796 = vld [vmem:[#allocation2 + $0x1c8] sm:$0xff]
      %v797 = vld [vmem:[#allocation2 + $0x1d0] sm:$0xff]
      %v798 = vld [vmem:[#allocation2 + $0x1d8] sm:$0xff]
      %v799 = vld [vmem:[#allocation2 + $0x1e0] sm:$0xff]
      %v800 = vld [vmem:[#allocation2 + $0x1e8] sm:$0xff]
      %v801 = vld [vmem:[#allocation2 + $0x1f0] sm:$0xff]
      %v802 = vld [vmem:[#allocation2 + $0x1f8] sm:$0xff]
      %v803 = vperm.slane %v511, 0
      %v804 = vmul.f32 %v787, %v803
      %v805 = vmul.f32 %v788, %v803
      %v806 = vmul.f32 %v789, %v803
      %v807 = vmul.f32 %v790, %v803
      %v808 = vmul.f32 %v791, %v803
      %v809 = vmul.f32 %v792, %v803
      %v810 = vmul.f32 %v793, %v803
      %v811 = vmul.f32 %v794, %v803
      %v812 = vmul.f32 %v795, %v803
      %v813 = vmul.f32 %v796, %v803
      %v814 = vmul.f32 %v797, %v803
      %v815 = vmul.f32 %v798, %v803
      %v816 = vmul.f32 %v799, %v803
      %v817 = vmul.f32 %v800, %v803
      %v818 = vmul.f32 %v801, %v803
      %v819 = vmul.f32 %v802, %v803
      %v820 = vperm.slane %v513, 0
      %v821 = vadd.f32 %v804, %v820
      %v822 = vadd.f32 %v805, %v820
      %v823 = vadd.f32 %v806, %v820
      %v824 = vadd.f32 %v807, %v820
      %v825 = vadd.f32 %v808, %v820
      %v826 = vadd.f32 %v809, %v820
      %v827 = vadd.f32 %v810, %v820
      %v828 = vadd.f32 %v811, %v820
      %v829 = vadd.f32 %v812, %v820
      %v830 = vadd.f32 %v813, %v820
      %v831 = vadd.f32 %v814, %v820
      %v832 = vadd.f32 %v815, %v820
      %v833 = vadd.f32 %v816, %v820
      %v834 = vadd.f32 %v817, %v820
      %v835 = vadd.f32 %v818, %v820
      %v836 = vadd.f32 %v819, %v820
      %v837 = vmax.f32 %v821, 0.0
      %v838 = vmax.f32 %v822, 0.0
      %v839 = vmax.f32 %v823, 0.0
      %v840 = vmax.f32 %v824, 0.0
      %v841 = vmax.f32 %v825, 0.0
      %v842 = vmax.f32 %v826, 0.0
      %v843 = vmax.f32 %v827, 0.0
      %v844 = vmax.f32 %v828, 0.0
      %v845 = vmax.f32 %v829, 0.0
      %v846 = vmax.f32 %v830, 0.0
      %v847 = vmax.f32 %v831, 0.0
      %v848 = vmax.f32 %v832, 0.0
      %v849 = vmax.f32 %v833, 0.0
      %v850 = vmax.f32 %v834, 0.0
      %v851 = vmax.f32 %v835, 0.0
      %v852 = vmax.f32 %v836, 0.0
      %v853 = vmul.f32 %v837, %v274
      %v854 = vmul.f32 %v838, %v275
      %v855 = vmul.f32 %v839, %v276
      %v856 = vmul.f32 %v840, %v277
      %v857 = vmul.f32 %v841, %v278
      %v858 = vmul.f32 %v842, %v279
      %v859 = vmul.f32 %v843, %v280
      %v860 = vmul.f32 %v844, %v281
      %v861 = vmul.f32 %v845, %v282
      %v862 = vmul.f32 %v846, %v283
      %v863 = vmul.f32 %v847, %v284
      %v864 = vmul.f32 %v848, %v285
      %v865 = vmul.f32 %v849, %v286
      %v866 = vmul.f32 %v850, %v287
      %v867 = vmul.f32 %v851, %v288
      %v868 = vmul.f32 %v852, %v289
      %v869 = vpack.c.bf16 %v854, %v853
      %v870 = vpack.c.bf16 %v856, %v855
      %v871 = vpack.c.bf16 %v858, %v857
      %v872 = vpack.c.bf16 %v860, %v859
      %v873 = vpack.c.bf16 %v862, %v861
      %v874 = vpack.c.bf16 %v864, %v863
      %v875 = vpack.c.bf16 %v866, %v865
      %v876 = vpack.c.bf16 %v868, %v867
      %v893 = vunpack.c.l.b16 %v514
      %v894 = vunpack.c.l.b16 %v515
      %v895 = vunpack.c.l.b16 %v516
      %v896 = vunpack.c.l.b16 %v517
      %v897 = vunpack.c.l.b16 %v518
      %v898 = vunpack.c.l.b16 %v519
      %v899 = vunpack.c.l.b16 %v520
      %v900 = vunpack.c.l.b16 %v521
      %v901 = vunpack.c.l.b16 %v522
      %v902 = vunpack.c.l.b16 %v523
      %v903 = vunpack.c.l.b16 %v524
      %v904 = vunpack.c.l.b16 %v525
      %v905 = vunpack.c.l.b16 %v526
      %v906 = vunpack.c.l.b16 %v527
      %v907 = vunpack.c.l.b16 %v528
      %v908 = vunpack.c.l.b16 %v529
      %v909 = vpack.c.b16 %v894, %v893
      %v910 = vpack.c.b16 %v896, %v895
      %v911 = vpack.c.b16 %v898, %v897
      %v912 = vpack.c.b16 %v900, %v899
      %v913 = vpack.c.b16 %v902, %v901
      %v914 = vpack.c.b16 %v904, %v903
      %v915 = vpack.c.b16 %v906, %v905
      %v916 = vpack.c.b16 %v908, %v907
      %925 = vmatpush.bf16.msra.mxu0 %v916
      %926 = vmatpush.bf16.msra.mxu0 %v915
      %927 = vmatpush.bf16.msra.mxu0 %v914
      %928 = vmatpush.bf16.msra.mxu0 %v913
      %929 = vmatpush.bf16.msra.mxu0 %v912
      %930 = vmatpush.bf16.msra.mxu0 %v911
      %931 = vmatpush.bf16.msra.mxu0 %v910
      %932 = vmatpush.bf16.msra.mxu0 %v909
      %933 = vmatmul.bf16.gmra.mxu0 %v869
      %v934 = vpop.f32.mrf.mxu0
      %v935 = vadd.f32 0.0, %v934
      %v936 = vpop.f32.mrf.mxu0
      %v937 = vadd.f32 0.0, %v936
      %938 = vmatmul.bf16.gmra.mxu0 %v870
      %v939 = vpop.f32.mrf.mxu0
      %v940 = vadd.f32 0.0, %v939
      %v941 = vpop.f32.mrf.mxu0
      %v942 = vadd.f32 0.0, %v941
      %943 = vmatmul.bf16.gmra.mxu0 %v871
      %v944 = vpop.f32.mrf.mxu0
      %v945 = vadd.f32 0.0, %v944
      %v946 = vpop.f32.mrf.mxu0
      %v947 = vadd.f32 0.0, %v946
      %948 = vmatmul.bf16.gmra.mxu0 %v872
      %v949 = vpop.f32.mrf.mxu0
      %v950 = vadd.f32 0.0, %v949
      %v951 = vpop.f32.mrf.mxu0
      %v952 = vadd.f32 0.0, %v951
      %953 = vmatmul.bf16.gmra.mxu0 %v873
      %v954 = vpop.f32.mrf.mxu0
      %v955 = vadd.f32 0.0, %v954
      %v956 = vpop.f32.mrf.mxu0
      %v957 = vadd.f32 0.0, %v956
      %958 = vmatmul.bf16.gmra.mxu0 %v874
      %v959 = vpop.f32.mrf.mxu0
      %v960 = vadd.f32 0.0, %v959
      %v961 = vpop.f32.mrf.mxu0
      %v962 = vadd.f32 0.0, %v961
      %963 = vmatmul.bf16.gmra.mxu0 %v875
      %v964 = vpop.f32.mrf.mxu0
      %v965 = vadd.f32 0.0, %v964
      %v966 = vpop.f32.mrf.mxu0
      %v967 = vadd.f32 0.0, %v966
      %968 = vmatmul.bf16.gmra.mxu0 %v876
      %v969 = vpop.f32.mrf.mxu0
      %v970 = vadd.f32 0.0, %v969
      %v971 = vpop.f32.mrf.mxu0
      %v972 = vadd.f32 0.0, %v971
      %973 = vdwg.mxu0
      %974 = vst [vmem:[#allocation2 + $0x180] sm:$0xff] %v935
      %975 = vst [vmem:[#allocation2 + $0x188] sm:$0xff] %v937
      %976 = vst [vmem:[#allocation2 + $0x190] sm:$0xff] %v940
      %977 = vst [vmem:[#allocation2 + $0x198] sm:$0xff] %v942
      %978 = vst [vmem:[#allocation2 + $0x1a0] sm:$0xff] %v945
      %979 = vst [vmem:[#allocation2 + $0x1a8] sm:$0xff] %v947
      %980 = vst [vmem:[#allocation2 + $0x1b0] sm:$0xff] %v950
      %981 = vst [vmem:[#allocation2 + $0x1b8] sm:$0xff] %v952
      %982 = vst [vmem:[#allocation2 + $0x1c0] sm:$0xff] %v955
      %983 = vst [vmem:[#allocation2 + $0x1c8] sm:$0xff] %v957
      %984 = vst [vmem:[#allocation2 + $0x1d0] sm:$0xff] %v960
      %985 = vst [vmem:[#allocation2 + $0x1d8] sm:$0xff] %v962
      %986 = vst [vmem:[#allocation2 + $0x1e0] sm:$0xff] %v965
      %987 = vst [vmem:[#allocation2 + $0x1e8] sm:$0xff] %v967
      %988 = vst [vmem:[#allocation2 + $0x1f0] sm:$0xff] %v970
      %989 = vst [vmem:[#allocation2 + $0x1f8] sm:$0xff] %v972
      %v990 = vadd.f32 %v935, %v937
      %v991 = vadd.f32 %v990, %v940
      %v992 = vadd.f32 %v991, %v942
      %v993 = vadd.f32 %v992, %v945
      %v994 = vadd.f32 %v993, %v947
      %v995 = vadd.f32 %v994, %v950
      %v996 = vadd.f32 %v995, %v952
      %v997 = vadd.f32 %v996, %v955
      %v998 = vadd.f32 %v997, %v957
      %v999 = vadd.f32 %v998, %v960
      %v1000 = vadd.f32 %v999, %v962
      %v1001 = vadd.f32 %v1000, %v965
      %v1002 = vadd.f32 %v1001, %v967
      %v1003 = vadd.f32 %v1002, %v970
      %v1004 = vadd.f32 %v1003, %v972
      %v1005 = vrot.slane %v1004, 4
      %v1006 = vadd.f32 %v1004, %v1005
      %v1007 = vrot.slane %v1006, 2
      %v1008 = vadd.f32 %v1006, %v1007
      %v1009 = vrot.slane %v1008, 1
      %v1010 = vadd.f32 %v1008, %v1009
      %v1011 = vadd.f32 %v536, %v1010
      %v1012 = vmul.f32 %v935, %v935
      %v1013 = vmul.f32 %v937, %v937
      %v1014 = vmul.f32 %v940, %v940
      %v1015 = vmul.f32 %v942, %v942
      %v1016 = vmul.f32 %v945, %v945
      %v1017 = vmul.f32 %v947, %v947
      %v1018 = vmul.f32 %v950, %v950
      %v1019 = vmul.f32 %v952, %v952
      %v1020 = vmul.f32 %v955, %v955
      %v1021 = vmul.f32 %v957, %v957
      %v1022 = vmul.f32 %v960, %v960
      %v1023 = vmul.f32 %v962, %v962
      %v1024 = vmul.f32 %v965, %v965
      %v1025 = vmul.f32 %v967, %v967
      %v1026 = vmul.f32 %v970, %v970
      %v1027 = vmul.f32 %v972, %v972
      %v1028 = vadd.f32 %v1012, %v1013
      %v1029 = vadd.f32 %v1028, %v1014
      %v1030 = vadd.f32 %v1029, %v1015
      %v1031 = vadd.f32 %v1030, %v1016
      %v1032 = vadd.f32 %v1031, %v1017
      %v1033 = vadd.f32 %v1032, %v1018
      %v1034 = vadd.f32 %v1033, %v1019
      %v1035 = vadd.f32 %v1034, %v1020
      %v1036 = vadd.f32 %v1035, %v1021
      %v1037 = vadd.f32 %v1036, %v1022
      %v1038 = vadd.f32 %v1037, %v1023
      %v1039 = vadd.f32 %v1038, %v1024
      %v1040 = vadd.f32 %v1039, %v1025
      %v1041 = vadd.f32 %v1040, %v1026
      %v1042 = vadd.f32 %v1041, %v1027
      %v1043 = vrot.slane %v1042, 4
      %v1044 = vadd.f32 %v1042, %v1043
      %v1045 = vrot.slane %v1044, 2
      %v1046 = vadd.f32 %v1044, %v1045
      %v1047 = vrot.slane %v1046, 1
      %v1048 = vadd.f32 %v1046, %v1047
      %v1049 = vadd.f32 %v537, %v1048
      %v1050 = vld [vmem:[%s3 + $0x1] sm:$0x1]
      %v1051 = vld [vmem:[%s4 + $0x1] sm:$0x1]
      %v1052 = vmul.f32 %v1011, 0.0020833334
      %v1053 = vmul.f32 %v1049, 0.0020833334
      %v1054 = vmul.f32 %v1052, %v1052
      %v1055 = vsub.f32 %v1053, %v1054
      %v1056 = vmax.f32 %v1055, 0.0
      %v1057 = vadd.f32 %v1056, 1e-05
      %v1058 = vrsqrt.pop %v1057
      %v1059 = vmul.f32 %v1058, %v1057
      %v1060 = vmul.f32 %v1059, %v1058
      %v1061 = vmul.f32 0.5, %v1060
      %v1062 = vsub.f32 1.5, %v1061
      %v1063 = vmul.f32 %v1058, %v1062
      %vm1064 = vweird.f32 %v1057
      %vm1065 = vweird.f32 %v1058
      %vm1066 = vmor %vm1064, %vm1065
      %v1067 = vsel %vm1066, %v1058, %v1063
      %v1068 = vmul.f32 %v1050, %v1067
      %v1069 = vmul.f32 %v1052, %v1068
      %v1070 = vsub.f32 %v1051, %v1069
      %s1071 = scalar_lea.vmem %s2, 64
      %v1072 = vld [vmem:[%s1071] sm:$0xf]
      %v1073 = vld [vmem:[%s1071 + $0x4] sm:$0xf]
      %v1074 = vld [vmem:[%s1071 + $0x8] sm:$0xf]
      %v1075 = vld [vmem:[%s1071 + $0xc] sm:$0xf]
      %v1076 = vld [vmem:[%s1071 + $0x10] sm:$0xf]
      %v1077 = vld [vmem:[%s1071 + $0x14] sm:$0xf]
      %v1078 = vld [vmem:[%s1071 + $0x18] sm:$0xf]
      %v1079 = vld [vmem:[%s1071 + $0x1c] sm:$0xf]
      %v1080 = vld [vmem:[%s1071 + $0x20] sm:$0xf]
      %v1081 = vld [vmem:[%s1071 + $0x24] sm:$0xf]
      %v1082 = vld [vmem:[%s1071 + $0x28] sm:$0xf]
      %v1083 = vld [vmem:[%s1071 + $0x2c] sm:$0xf]
      %v1084 = vld [vmem:[%s1071 + $0x30] sm:$0xf]
      %v1085 = vld [vmem:[%s1071 + $0x34] sm:$0xf]
      %v1086 = vld [vmem:[%s1071 + $0x38] sm:$0xf]
      %v1087 = vld [vmem:[%s1071 + $0x3c] sm:$0xf]
      loop: start=0, step=1, limit=3
      $region55: #{encoder_subtrack_d_forward.1} parent=39 // loop_pre_header
        _
      $region56: #{encoder_subtrack_d_forward.1} parent=39 // loop_header
        %s1089 = sphi 0, %s1093
        %p1090 = scmp.ge.s32.totalorder %s1089, 3
        %v1094 = vphi 0.0, %v1306
        %v1095 = vphi 0.0, %v1344
      $region57: #{encoder_subtrack_d_forward.1} parent=39 // loop_header_branch
        %1092 = sbr.rel (%p1090) target = $region61
      $region58: #{encoder_subtrack_d_forward.1} parent=39 // loop_body
        %s1096 = smul.u32 %s1089, 128
        %s1097 = scalar_lea.vmem [#allocation2], %s1096
        %v1098 = vld [vmem:[%s1097] sm:$0xff]
        %v1099 = vld [vmem:[%s1097 + $0x8] sm:$0xff]
        %v1100 = vld [vmem:[%s1097 + $0x10] sm:$0xff]
        %v1101 = vld [vmem:[%s1097 + $0x18] sm:$0xff]
        %v1102 = vld [vmem:[%s1097 + $0x20] sm:$0xff]
        %v1103 = vld [vmem:[%s1097 + $0x28] sm:$0xff]
        %v1104 = vld [vmem:[%s1097 + $0x30] sm:$0xff]
        %v1105 = vld [vmem:[%s1097 + $0x38] sm:$0xff]
        %v1106 = vld [vmem:[%s1097 + $0x40] sm:$0xff]
        %v1107 = vld [vmem:[%s1097 + $0x48] sm:$0xff]
        %v1108 = vld [vmem:[%s1097 + $0x50] sm:$0xff]
        %v1109 = vld [vmem:[%s1097 + $0x58] sm:$0xff]
        %v1110 = vld [vmem:[%s1097 + $0x60] sm:$0xff]
        %v1111 = vld [vmem:[%s1097 + $0x68] sm:$0xff]
        %v1112 = vld [vmem:[%s1097 + $0x70] sm:$0xff]
        %v1113 = vld [vmem:[%s1097 + $0x78] sm:$0xff]
        %v1114 = vperm.slane %v1068, 0
        %v1115 = vmul.f32 %v1098, %v1114
        %v1116 = vmul.f32 %v1099, %v1114
        %v1117 = vmul.f32 %v1100, %v1114
        %v1118 = vmul.f32 %v1101, %v1114
        %v1119 = vmul.f32 %v1102, %v1114
        %v1120 = vmul.f32 %v1103, %v1114
        %v1121 = vmul.f32 %v1104, %v1114
        %v1122 = vmul.f32 %v1105, %v1114
        %v1123 = vmul.f32 %v1106, %v1114
        %v1124 = vmul.f32 %v1107, %v1114
        %v1125 = vmul.f32 %v1108, %v1114
        %v1126 = vmul.f32 %v1109, %v1114
        %v1127 = vmul.f32 %v1110, %v1114
        %v1128 = vmul.f32 %v1111, %v1114
        %v1129 = vmul.f32 %v1112, %v1114
        %v1130 = vmul.f32 %v1113, %v1114
        %v1131 = vperm.slane %v1070, 0
        %v1132 = vadd.f32 %v1115, %v1131
        %v1133 = vadd.f32 %v1116, %v1131
        %v1134 = vadd.f32 %v1117, %v1131
        %v1135 = vadd.f32 %v1118, %v1131
        %v1136 = vadd.f32 %v1119, %v1131
        %v1137 = vadd.f32 %v1120, %v1131
        %v1138 = vadd.f32 %v1121, %v1131
        %v1139 = vadd.f32 %v1122, %v1131
        %v1140 = vadd.f32 %v1123, %v1131
        %v1141 = vadd.f32 %v1124, %v1131
        %v1142 = vadd.f32 %v1125, %v1131
        %v1143 = vadd.f32 %v1126, %v1131
        %v1144 = vadd.f32 %v1127, %v1131
        %v1145 = vadd.f32 %v1128, %v1131
        %v1146 = vadd.f32 %v1129, %v1131
        %v1147 = vadd.f32 %v1130, %v1131
        %v1148 = vmax.f32 %v1132, 0.0
        %v1149 = vmax.f32 %v1133, 0.0
        %v1150 = vmax.f32 %v1134, 0.0
        %v1151 = vmax.f32 %v1135, 0.0
        %v1152 = vmax.f32 %v1136, 0.0
        %v1153 = vmax.f32 %v1137, 0.0
        %v1154 = vmax.f32 %v1138, 0.0
        %v1155 = vmax.f32 %v1139, 0.0
        %v1156 = vmax.f32 %v1140, 0.0
        %v1157 = vmax.f32 %v1141, 0.0
        %v1158 = vmax.f32 %v1142, 0.0
        %v1159 = vmax.f32 %v1143, 0.0
        %v1160 = vmax.f32 %v1144, 0.0
        %v1161 = vmax.f32 %v1145, 0.0
        %v1162 = vmax.f32 %v1146, 0.0
        %v1163 = vmax.f32 %v1147, 0.0
        %v1164 = vpack.c.bf16 %v1149, %v1148
        %v1165 = vpack.c.bf16 %v1151, %v1150
        %v1166 = vpack.c.bf16 %v1153, %v1152
        %v1167 = vpack.c.bf16 %v1155, %v1154
        %v1168 = vpack.c.bf16 %v1157, %v1156
        %v1169 = vpack.c.bf16 %v1159, %v1158
        %v1170 = vpack.c.bf16 %v1161, %v1160
        %v1171 = vpack.c.bf16 %v1163, %v1162
        %v1188 = vunpack.c.l.b16 %v1072
        %v1189 = vunpack.c.l.b16 %v1073
        %v1190 = vunpack.c.l.b16 %v1074
        %v1191 = vunpack.c.l.b16 %v1075
        %v1192 = vunpack.c.l.b16 %v1076
        %v1193 = vunpack.c.l.b16 %v1077
        %v1194 = vunpack.c.l.b16 %v1078
        %v1195 = vunpack.c.l.b16 %v1079
        %v1196 = vunpack.c.l.b16 %v1080
        %v1197 = vunpack.c.l.b16 %v1081
        %v1198 = vunpack.c.l.b16 %v1082
        %v1199 = vunpack.c.l.b16 %v1083
        %v1200 = vunpack.c.l.b16 %v1084
        %v1201 = vunpack.c.l.b16 %v1085
        %v1202 = vunpack.c.l.b16 %v1086
        %v1203 = vunpack.c.l.b16 %v1087
        %v1204 = vpack.c.b16 %v1189, %v1188
        %v1205 = vpack.c.b16 %v1191, %v1190
        %v1206 = vpack.c.b16 %v1193, %v1192
        %v1207 = vpack.c.b16 %v1195, %v1194
        %v1208 = vpack.c.b16 %v1197, %v1196
        %v1209 = vpack.c.b16 %v1199, %v1198
        %v1210 = vpack.c.b16 %v1201, %v1200
        %v1211 = vpack.c.b16 %v1203, %v1202
        %1220 = vmatpush.bf16.msra.mxu0 %v1211
        %1221 = vmatpush.bf16.msra.mxu0 %v1210
        %1222 = vmatpush.bf16.msra.mxu0 %v1209
        %1223 = vmatpush.bf16.msra.mxu0 %v1208
        %1224 = vmatpush.bf16.msra.mxu0 %v1207
        %1225 = vmatpush.bf16.msra.mxu0 %v1206
        %1226 = vmatpush.bf16.msra.mxu0 %v1205
        %1227 = vmatpush.bf16.msra.mxu0 %v1204
        %1228 = vmatmul.bf16.gmra.mxu0 %v1164
        %v1229 = vpop.f32.mrf.mxu0
        %v1230 = vadd.f32 0.0, %v1229
        %v1231 = vpop.f32.mrf.mxu0
        %v1232 = vadd.f32 0.0, %v1231
        %1233 = vmatmul.bf16.gmra.mxu0 %v1165
        %v1234 = vpop.f32.mrf.mxu0
        %v1235 = vadd.f32 0.0, %v1234
        %v1236 = vpop.f32.mrf.mxu0
        %v1237 = vadd.f32 0.0, %v1236
        %1238 = vmatmul.bf16.gmra.mxu0 %v1166
        %v1239 = vpop.f32.mrf.mxu0
        %v1240 = vadd.f32 0.0, %v1239
        %v1241 = vpop.f32.mrf.mxu0
        %v1242 = vadd.f32 0.0, %v1241
        %1243 = vmatmul.bf16.gmra.mxu0 %v1167
        %v1244 = vpop.f32.mrf.mxu0
        %v1245 = vadd.f32 0.0, %v1244
        %v1246 = vpop.f32.mrf.mxu0
        %v1247 = vadd.f32 0.0, %v1246
        %1248 = vmatmul.bf16.gmra.mxu0 %v1168
        %v1249 = vpop.f32.mrf.mxu0
        %v1250 = vadd.f32 0.0, %v1249
        %v1251 = vpop.f32.mrf.mxu0
        %v1252 = vadd.f32 0.0, %v1251
        %1253 = vmatmul.bf16.gmra.mxu0 %v1169
        %v1254 = vpop.f32.mrf.mxu0
        %v1255 = vadd.f32 0.0, %v1254
        %v1256 = vpop.f32.mrf.mxu0
        %v1257 = vadd.f32 0.0, %v1256
        %1258 = vmatmul.bf16.gmra.mxu0 %v1170
        %v1259 = vpop.f32.mrf.mxu0
        %v1260 = vadd.f32 0.0, %v1259
        %v1261 = vpop.f32.mrf.mxu0
        %v1262 = vadd.f32 0.0, %v1261
        %1263 = vmatmul.bf16.gmra.mxu0 %v1171
        %v1264 = vpop.f32.mrf.mxu0
        %v1265 = vadd.f32 0.0, %v1264
        %v1266 = vpop.f32.mrf.mxu0
        %v1267 = vadd.f32 0.0, %v1266
        %1268 = vdwg.mxu0
        %1269 = vst [vmem:[%s1097] sm:$0xff] %v1230
        %1270 = vst [vmem:[%s1097 + $0x8] sm:$0xff] %v1232
        %1271 = vst [vmem:[%s1097 + $0x10] sm:$0xff] %v1235
        %1272 = vst [vmem:[%s1097 + $0x18] sm:$0xff] %v1237
        %1273 = vst [vmem:[%s1097 + $0x20] sm:$0xff] %v1240
        %1274 = vst [vmem:[%s1097 + $0x28] sm:$0xff] %v1242
        %1275 = vst [vmem:[%s1097 + $0x30] sm:$0xff] %v1245
        %1276 = vst [vmem:[%s1097 + $0x38] sm:$0xff] %v1247
        %1277 = vst [vmem:[%s1097 + $0x40] sm:$0xff] %v1250
        %1278 = vst [vmem:[%s1097 + $0x48] sm:$0xff] %v1252
        %1279 = vst [vmem:[%s1097 + $0x50] sm:$0xff] %v1255
        %1280 = vst [vmem:[%s1097 + $0x58] sm:$0xff] %v1257
        %1281 = vst [vmem:[%s1097 + $0x60] sm:$0xff] %v1260
        %1282 = vst [vmem:[%s1097 + $0x68] sm:$0xff] %v1262
        %1283 = vst [vmem:[%s1097 + $0x70] sm:$0xff] %v1265
        %1284 = vst [vmem:[%s1097 + $0x78] sm:$0xff] %v1267
        %v1285 = vadd.f32 %v1230, %v1232
        %v1286 = vadd.f32 %v1285, %v1235
        %v1287 = vadd.f32 %v1286, %v1237
        %v1288 = vadd.f32 %v1287, %v1240
        %v1289 = vadd.f32 %v1288, %v1242
        %v1290 = vadd.f32 %v1289, %v1245
        %v1291 = vadd.f32 %v1290, %v1247
        %v1292 = vadd.f32 %v1291, %v1250
        %v1293 = vadd.f32 %v1292, %v1252
        %v1294 = vadd.f32 %v1293, %v1255
        %v1295 = vadd.f32 %v1294, %v1257
        %v1296 = vadd.f32 %v1295, %v1260
        %v1297 = vadd.f32 %v1296, %v1262
        %v1298 = vadd.f32 %v1297, %v1265
        %v1299 = vadd.f32 %v1298, %v1267
        %v1300 = vrot.slane %v1299, 4
        %v1301 = vadd.f32 %v1299, %v1300
        %v1302 = vrot.slane %v1301, 2
        %v1303 = vadd.f32 %v1301, %v1302
        %v1304 = vrot.slane %v1303, 1
        %v1305 = vadd.f32 %v1303, %v1304
        %v1306 = vadd.f32 %v1094, %v1305
        %v1307 = vmul.f32 %v1230, %v1230
        %v1308 = vmul.f32 %v1232, %v1232
        %v1309 = vmul.f32 %v1235, %v1235
        %v1310 = vmul.f32 %v1237, %v1237
        %v1311 = vmul.f32 %v1240, %v1240
        %v1312 = vmul.f32 %v1242, %v1242
        %v1313 = vmul.f32 %v1245, %v1245
        %v1314 = vmul.f32 %v1247, %v1247
        %v1315 = vmul.f32 %v1250, %v1250
        %v1316 = vmul.f32 %v1252, %v1252
        %v1317 = vmul.f32 %v1255, %v1255
        %v1318 = vmul.f32 %v1257, %v1257
        %v1319 = vmul.f32 %v1260, %v1260
        %v1320 = vmul.f32 %v1262, %v1262
        %v1321 = vmul.f32 %v1265, %v1265
        %v1322 = vmul.f32 %v1267, %v1267
        %v1323 = vadd.f32 %v1307, %v1308
        %v1324 = vadd.f32 %v1323, %v1309
        %v1325 = vadd.f32 %v1324, %v1310
        %v1326 = vadd.f32 %v1325, %v1311
        %v1327 = vadd.f32 %v1326, %v1312
        %v1328 = vadd.f32 %v1327, %v1313
        %v1329 = vadd.f32 %v1328, %v1314
        %v1330 = vadd.f32 %v1329, %v1315
        %v1331 = vadd.f32 %v1330, %v1316
        %v1332 = vadd.f32 %v1331, %v1317
        %v1333 = vadd.f32 %v1332, %v1318
        %v1334 = vadd.f32 %v1333, %v1319
        %v1335 = vadd.f32 %v1334, %v1320
        %v1336 = vadd.f32 %v1335, %v1321
        %v1337 = vadd.f32 %v1336, %v1322
        %v1338 = vrot.slane %v1337, 4
        %v1339 = vadd.f32 %v1337, %v1338
        %v1340 = vrot.slane %v1339, 2
        %v1341 = vadd.f32 %v1339, %v1340
        %v1342 = vrot.slane %v1341, 1
        %v1343 = vadd.f32 %v1341, %v1342
        %v1344 = vadd.f32 %v1095, %v1343
      $region59: #{encoder_subtrack_d_forward.1} parent=39 // loop_footer
        %s1093 = sadd.s32 1, %s1089
      $region60: #{encoder_subtrack_d_forward.1} parent=39 // loop_footer_branch
        %1088 = sbr.rel target = $region56
      $region61: #{encoder_subtrack_d_forward.1} parent=39 // loop_exit
        _
      %v1345 = vld [vmem:[#allocation2 + $0x180] sm:$0xff]
      %v1346 = vld [vmem:[#allocation2 + $0x188] sm:$0xff]
      %v1347 = vld [vmem:[#allocation2 + $0x190] sm:$0xff]
      %v1348 = vld [vmem:[#allocation2 + $0x198] sm:$0xff]
      %v1349 = vld [vmem:[#allocation2 + $0x1a0] sm:$0xff]
      %v1350 = vld [vmem:[#allocation2 + $0x1a8] sm:$0xff]
      %v1351 = vld [vmem:[#allocation2 + $0x1b0] sm:$0xff]
      %v1352 = vld [vmem:[#allocation2 + $0x1b8] sm:$0xff]
      %v1353 = vld [vmem:[#allocation2 + $0x1c0] sm:$0xff]
      %v1354 = vld [vmem:[#allocation2 + $0x1c8] sm:$0xff]
      %v1355 = vld [vmem:[#allocation2 + $0x1d0] sm:$0xff]
      %v1356 = vld [vmem:[#allocation2 + $0x1d8] sm:$0xff]
      %v1357 = vld [vmem:[#allocation2 + $0x1e0] sm:$0xff]
      %v1358 = vld [vmem:[#allocation2 + $0x1e8] sm:$0xff]
      %v1359 = vld [vmem:[#allocation2 + $0x1f0] sm:$0xff]
      %v1360 = vld [vmem:[#allocation2 + $0x1f8] sm:$0xff]
      %v1361 = vperm.slane %v1068, 0
      %v1362 = vmul.f32 %v1345, %v1361
      %v1363 = vmul.f32 %v1346, %v1361
      %v1364 = vmul.f32 %v1347, %v1361
      %v1365 = vmul.f32 %v1348, %v1361
      %v1366 = vmul.f32 %v1349, %v1361
      %v1367 = vmul.f32 %v1350, %v1361
      %v1368 = vmul.f32 %v1351, %v1361
      %v1369 = vmul.f32 %v1352, %v1361
      %v1370 = vmul.f32 %v1353, %v1361
      %v1371 = vmul.f32 %v1354, %v1361
      %v1372 = vmul.f32 %v1355, %v1361
      %v1373 = vmul.f32 %v1356, %v1361
      %v1374 = vmul.f32 %v1357, %v1361
      %v1375 = vmul.f32 %v1358, %v1361
      %v1376 = vmul.f32 %v1359, %v1361
      %v1377 = vmul.f32 %v1360, %v1361
      %v1378 = vperm.slane %v1070, 0
      %v1379 = vadd.f32 %v1362, %v1378
      %v1380 = vadd.f32 %v1363, %v1378
      %v1381 = vadd.f32 %v1364, %v1378
      %v1382 = vadd.f32 %v1365, %v1378
      %v1383 = vadd.f32 %v1366, %v1378
      %v1384 = vadd.f32 %v1367, %v1378
      %v1385 = vadd.f32 %v1368, %v1378
      %v1386 = vadd.f32 %v1369, %v1378
      %v1387 = vadd.f32 %v1370, %v1378
      %v1388 = vadd.f32 %v1371, %v1378
      %v1389 = vadd.f32 %v1372, %v1378
      %v1390 = vadd.f32 %v1373, %v1378
      %v1391 = vadd.f32 %v1374, %v1378
      %v1392 = vadd.f32 %v1375, %v1378
      %v1393 = vadd.f32 %v1376, %v1378
      %v1394 = vadd.f32 %v1377, %v1378
      %v1395 = vmax.f32 %v1379, 0.0
      %v1396 = vmax.f32 %v1380, 0.0
      %v1397 = vmax.f32 %v1381, 0.0
      %v1398 = vmax.f32 %v1382, 0.0
      %v1399 = vmax.f32 %v1383, 0.0
      %v1400 = vmax.f32 %v1384, 0.0
      %v1401 = vmax.f32 %v1385, 0.0
      %v1402 = vmax.f32 %v1386, 0.0
      %v1403 = vmax.f32 %v1387, 0.0
      %v1404 = vmax.f32 %v1388, 0.0
      %v1405 = vmax.f32 %v1389, 0.0
      %v1406 = vmax.f32 %v1390, 0.0
      %v1407 = vmax.f32 %v1391, 0.0
      %v1408 = vmax.f32 %v1392, 0.0
      %v1409 = vmax.f32 %v1393, 0.0
      %v1410 = vmax.f32 %v1394, 0.0
      %v1411 = vmul.f32 %v1395, %v274
      %v1412 = vmul.f32 %v1396, %v275
      %v1413 = vmul.f32 %v1397, %v276
      %v1414 = vmul.f32 %v1398, %v277
      %v1415 = vmul.f32 %v1399, %v278
      %v1416 = vmul.f32 %v1400, %v279
      %v1417 = vmul.f32 %v1401, %v280
      %v1418 = vmul.f32 %v1402, %v281
      %v1419 = vmul.f32 %v1403, %v282
      %v1420 = vmul.f32 %v1404, %v283
      %v1421 = vmul.f32 %v1405, %v284
      %v1422 = vmul.f32 %v1406, %v285
      %v1423 = vmul.f32 %v1407, %v286
      %v1424 = vmul.f32 %v1408, %v287
      %v1425 = vmul.f32 %v1409, %v288
      %v1426 = vmul.f32 %v1410, %v289
      %v1427 = vpack.c.bf16 %v1412, %v1411
      %v1428 = vpack.c.bf16 %v1414, %v1413
      %v1429 = vpack.c.bf16 %v1416, %v1415
      %v1430 = vpack.c.bf16 %v1418, %v1417
      %v1431 = vpack.c.bf16 %v1420, %v1419
      %v1432 = vpack.c.bf16 %v1422, %v1421
      %v1433 = vpack.c.bf16 %v1424, %v1423
      %v1434 = vpack.c.bf16 %v1426, %v1425
      %v1451 = vunpack.c.l.b16 %v1072
      %v1452 = vunpack.c.l.b16 %v1073
      %v1453 = vunpack.c.l.b16 %v1074
      %v1454 = vunpack.c.l.b16 %v1075
      %v1455 = vunpack.c.l.b16 %v1076
      %v1456 = vunpack.c.l.b16 %v1077
      %v1457 = vunpack.c.l.b16 %v1078
      %v1458 = vunpack.c.l.b16 %v1079
      %v1459 = vunpack.c.l.b16 %v1080
      %v1460 = vunpack.c.l.b16 %v1081
      %v1461 = vunpack.c.l.b16 %v1082
      %v1462 = vunpack.c.l.b16 %v1083
      %v1463 = vunpack.c.l.b16 %v1084
      %v1464 = vunpack.c.l.b16 %v1085
      %v1465 = vunpack.c.l.b16 %v1086
      %v1466 = vunpack.c.l.b16 %v1087
      %v1467 = vpack.c.b16 %v1452, %v1451
      %v1468 = vpack.c.b16 %v1454, %v1453
      %v1469 = vpack.c.b16 %v1456, %v1455
      %v1470 = vpack.c.b16 %v1458, %v1457
      %v1471 = vpack.c.b16 %v1460, %v1459
      %v1472 = vpack.c.b16 %v1462, %v1461
      %v1473 = vpack.c.b16 %v1464, %v1463
      %v1474 = vpack.c.b16 %v1466, %v1465
      %1483 = vmatpush.bf16.msra.mxu0 %v1474
      %1484 = vmatpush.bf16.msra.mxu0 %v1473
      %1485 = vmatpush.bf16.msra.mxu0 %v1472
      %1486 = vmatpush.bf16.msra.mxu0 %v1471
      %1487 = vmatpush.bf16.msra.mxu0 %v1470
      %1488 = vmatpush.bf16.msra.mxu0 %v1469
      %1489 = vmatpush.bf16.msra.mxu0 %v1468
      %1490 = vmatpush.bf16.msra.mxu0 %v1467
      %1491 = vmatmul.bf16.gmra.mxu0 %v1427
      %v1492 = vpop.f32.mrf.mxu0
      %v1493 = vadd.f32 0.0, %v1492
      %v1494 = vpop.f32.mrf.mxu0
      %v1495 = vadd.f32 0.0, %v1494
      %1496 = vmatmul.bf16.gmra.mxu0 %v1428
      %v1497 = vpop.f32.mrf.mxu0
      %v1498 = vadd.f32 0.0, %v1497
      %v1499 = vpop.f32.mrf.mxu0
      %v1500 = vadd.f32 0.0, %v1499
      %1501 = vmatmul.bf16.gmra.mxu0 %v1429
      %v1502 = vpop.f32.mrf.mxu0
      %v1503 = vadd.f32 0.0, %v1502
      %v1504 = vpop.f32.mrf.mxu0
      %v1505 = vadd.f32 0.0, %v1504
      %1506 = vmatmul.bf16.gmra.mxu0 %v1430
      %v1507 = vpop.f32.mrf.mxu0
      %v1508 = vadd.f32 0.0, %v1507
      %v1509 = vpop.f32.mrf.mxu0
      %v1510 = vadd.f32 0.0, %v1509
      %1511 = vmatmul.bf16.gmra.mxu0 %v1431
      %v1512 = vpop.f32.mrf.mxu0
      %v1513 = vadd.f32 0.0, %v1512
      %v1514 = vpop.f32.mrf.mxu0
      %v1515 = vadd.f32 0.0, %v1514
      %1516 = vmatmul.bf16.gmra.mxu0 %v1432
      %v1517 = vpop.f32.mrf.mxu0
      %v1518 = vadd.f32 0.0, %v1517
      %v1519 = vpop.f32.mrf.mxu0
      %v1520 = vadd.f32 0.0, %v1519
      %1521 = vmatmul.bf16.gmra.mxu0 %v1433
      %v1522 = vpop.f32.mrf.mxu0
      %v1523 = vadd.f32 0.0, %v1522
      %v1524 = vpop.f32.mrf.mxu0
      %v1525 = vadd.f32 0.0, %v1524
      %1526 = vmatmul.bf16.gmra.mxu0 %v1434
      %v1527 = vpop.f32.mrf.mxu0
      %v1528 = vadd.f32 0.0, %v1527
      %v1529 = vpop.f32.mrf.mxu0
      %v1530 = vadd.f32 0.0, %v1529
      %1531 = vdwg.mxu0
      %1532 = vst [vmem:[#allocation2 + $0x180] sm:$0xff] %v1493
      %1533 = vst [vmem:[#allocation2 + $0x188] sm:$0xff] %v1495
      %1534 = vst [vmem:[#allocation2 + $0x190] sm:$0xff] %v1498
      %1535 = vst [vmem:[#allocation2 + $0x198] sm:$0xff] %v1500
      %1536 = vst [vmem:[#allocation2 + $0x1a0] sm:$0xff] %v1503
      %1537 = vst [vmem:[#allocation2 + $0x1a8] sm:$0xff] %v1505
      %1538 = vst [vmem:[#allocation2 + $0x1b0] sm:$0xff] %v1508
      %1539 = vst [vmem:[#allocation2 + $0x1b8] sm:$0xff] %v1510
      %1540 = vst [vmem:[#allocation2 + $0x1c0] sm:$0xff] %v1513
      %1541 = vst [vmem:[#allocation2 + $0x1c8] sm:$0xff] %v1515
      %1542 = vst [vmem:[#allocation2 + $0x1d0] sm:$0xff] %v1518
      %1543 = vst [vmem:[#allocation2 + $0x1d8] sm:$0xff] %v1520
      %1544 = vst [vmem:[#allocation2 + $0x1e0] sm:$0xff] %v1523
      %1545 = vst [vmem:[#allocation2 + $0x1e8] sm:$0xff] %v1525
      %1546 = vst [vmem:[#allocation2 + $0x1f0] sm:$0xff] %v1528
      %1547 = vst [vmem:[#allocation2 + $0x1f8] sm:$0xff] %v1530
      %v1548 = vadd.f32 %v1493, %v1495
      %v1549 = vadd.f32 %v1548, %v1498
      %v1550 = vadd.f32 %v1549, %v1500
      %v1551 = vadd.f32 %v1550, %v1503
      %v1552 = vadd.f32 %v1551, %v1505
      %v1553 = vadd.f32 %v1552, %v1508
      %v1554 = vadd.f32 %v1553, %v1510
      %v1555 = vadd.f32 %v1554, %v1513
      %v1556 = vadd.f32 %v1555, %v1515
      %v1557 = vadd.f32 %v1556, %v1518
      %v1558 = vadd.f32 %v1557, %v1520
      %v1559 = vadd.f32 %v1558, %v1523
      %v1560 = vadd.f32 %v1559, %v1525
      %v1561 = vadd.f32 %v1560, %v1528
      %v1562 = vadd.f32 %v1561, %v1530
      %v1563 = vrot.slane %v1562, 4
      %v1564 = vadd.f32 %v1562, %v1563
      %v1565 = vrot.slane %v1564, 2
      %v1566 = vadd.f32 %v1564, %v1565
      %v1567 = vrot.slane %v1566, 1
      %v1568 = vadd.f32 %v1566, %v1567
      %v1569 = vadd.f32 %v1094, %v1568
      %v1570 = vmul.f32 %v1493, %v1493
      %v1571 = vmul.f32 %v1495, %v1495
      %v1572 = vmul.f32 %v1498, %v1498
      %v1573 = vmul.f32 %v1500, %v1500
      %v1574 = vmul.f32 %v1503, %v1503
      %v1575 = vmul.f32 %v1505, %v1505
      %v1576 = vmul.f32 %v1508, %v1508
      %v1577 = vmul.f32 %v1510, %v1510
      %v1578 = vmul.f32 %v1513, %v1513
      %v1579 = vmul.f32 %v1515, %v1515
      %v1580 = vmul.f32 %v1518, %v1518
      %v1581 = vmul.f32 %v1520, %v1520
      %v1582 = vmul.f32 %v1523, %v1523
      %v1583 = vmul.f32 %v1525, %v1525
      %v1584 = vmul.f32 %v1528, %v1528
      %v1585 = vmul.f32 %v1530, %v1530
      %v1586 = vadd.f32 %v1570, %v1571
      %v1587 = vadd.f32 %v1586, %v1572
      %v1588 = vadd.f32 %v1587, %v1573
      %v1589 = vadd.f32 %v1588, %v1574
      %v1590 = vadd.f32 %v1589, %v1575
      %v1591 = vadd.f32 %v1590, %v1576
      %v1592 = vadd.f32 %v1591, %v1577
      %v1593 = vadd.f32 %v1592, %v1578
      %v1594 = vadd.f32 %v1593, %v1579
      %v1595 = vadd.f32 %v1594, %v1580
      %v1596 = vadd.f32 %v1595, %v1581
      %v1597 = vadd.f32 %v1596, %v1582
      %v1598 = vadd.f32 %v1597, %v1583
      %v1599 = vadd.f32 %v1598, %v1584
      %v1600 = vadd.f32 %v1599, %v1585
      %v1601 = vrot.slane %v1600, 4
      %v1602 = vadd.f32 %v1600, %v1601
      %v1603 = vrot.slane %v1602, 2
      %v1604 = vadd.f32 %v1602, %v1603
      %v1605 = vrot.slane %v1604, 1
      %v1606 = vadd.f32 %v1604, %v1605
      %v1607 = vadd.f32 %v1095, %v1606
      %v1608 = vld [vmem:[%s3 + $0x2] sm:$0x1]
      %v1609 = vld [vmem:[%s4 + $0x2] sm:$0x1]
      %v1610 = vmul.f32 %v1569, 0.0020833334
      %v1611 = vmul.f32 %v1607, 0.0020833334
      %v1612 = vmul.f32 %v1610, %v1610
      %v1613 = vsub.f32 %v1611, %v1612
      %v1614 = vmax.f32 %v1613, 0.0
      %v1615 = vadd.f32 %v1614, 1e-05
      %v1616 = vrsqrt.pop %v1615
      %v1617 = vmul.f32 %v1616, %v1615
      %v1618 = vmul.f32 %v1617, %v1616
      %v1619 = vmul.f32 0.5, %v1618
      %v1620 = vsub.f32 1.5, %v1619
      %v1621 = vmul.f32 %v1616, %v1620
      %vm1622 = vweird.f32 %v1615
      %vm1623 = vweird.f32 %v1616
      %vm1624 = vmor %vm1622, %vm1623
      %v1625 = vsel %vm1624, %v1616, %v1621
      %v1626 = vmul.f32 %v1608, %v1625
      %v1627 = vmul.f32 %v1610, %v1626
      %v1628 = vsub.f32 %v1609, %v1627
      %s1629 = scalar_lea.vmem %s2, 128
      %v1630 = vld [vmem:[%s1629] sm:$0xf]
      %v1631 = vld [vmem:[%s1629 + $0x4] sm:$0xf]
      %v1632 = vld [vmem:[%s1629 + $0x8] sm:$0xf]
      %v1633 = vld [vmem:[%s1629 + $0xc] sm:$0xf]
      %v1634 = vld [vmem:[%s1629 + $0x10] sm:$0xf]
      %v1635 = vld [vmem:[%s1629 + $0x14] sm:$0xf]
      %v1636 = vld [vmem:[%s1629 + $0x18] sm:$0xf]
      %v1637 = vld [vmem:[%s1629 + $0x1c] sm:$0xf]
      %v1638 = vld [vmem:[%s1629 + $0x20] sm:$0xf]
      %v1639 = vld [vmem:[%s1629 + $0x24] sm:$0xf]
      %v1640 = vld [vmem:[%s1629 + $0x28] sm:$0xf]
      %v1641 = vld [vmem:[%s1629 + $0x2c] sm:$0xf]
      %v1642 = vld [vmem:[%s1629 + $0x30] sm:$0xf]
      %v1643 = vld [vmem:[%s1629 + $0x34] sm:$0xf]
      %v1644 = vld [vmem:[%s1629 + $0x38] sm:$0xf]
      %v1645 = vld [vmem:[%s1629 + $0x3c] sm:$0xf]
      loop: start=0, step=1, limit=3
      $region62: #{encoder_subtrack_d_forward.1} parent=39 // loop_pre_header
        _
      $region63: #{encoder_subtrack_d_forward.1} parent=39 // loop_header
        %s1647 = sphi 0, %s1651
        %p1648 = scmp.ge.s32.totalorder %s1647, 3
        %v1652 = vphi 0.0, %v1864
        %v1653 = vphi 0.0, %v1902
      $region64: #{encoder_subtrack_d_forward.1} parent=39 // loop_header_branch
        %1650 = sbr.rel (%p1648) target = $region68
      $region65: #{encoder_subtrack_d_forward.1} parent=39 // loop_body
        %s1654 = smul.u32 %s1647, 128
        %s1655 = scalar_lea.vmem [#allocation2], %s1654
        %v1656 = vld [vmem:[%s1655] sm:$0xff]
        %v1657 = vld [vmem:[%s1655 + $0x8] sm:$0xff]
        %v1658 = vld [vmem:[%s1655 + $0x10] sm:$0xff]
        %v1659 = vld [vmem:[%s1655 + $0x18] sm:$0xff]
        %v1660 = vld [vmem:[%s1655 + $0x20] sm:$0xff]
        %v1661 = vld [vmem:[%s1655 + $0x28] sm:$0xff]
        %v1662 = vld [vmem:[%s1655 + $0x30] sm:$0xff]
        %v1663 = vld [vmem:[%s1655 + $0x38] sm:$0xff]
        %v1664 = vld [vmem:[%s1655 + $0x40] sm:$0xff]
        %v1665 = vld [vmem:[%s1655 + $0x48] sm:$0xff]
        %v1666 = vld [vmem:[%s1655 + $0x50] sm:$0xff]
        %v1667 = vld [vmem:[%s1655 + $0x58] sm:$0xff]
        %v1668 = vld [vmem:[%s1655 + $0x60] sm:$0xff]
        %v1669 = vld [vmem:[%s1655 + $0x68] sm:$0xff]
        %v1670 = vld [vmem:[%s1655 + $0x70] sm:$0xff]
        %v1671 = vld [vmem:[%s1655 + $0x78] sm:$0xff]
        %v1672 = vperm.slane %v1626, 0
        %v1673 = vmul.f32 %v1656, %v1672
        %v1674 = vmul.f32 %v1657, %v1672
        %v1675 = vmul.f32 %v1658, %v1672
        %v1676 = vmul.f32 %v1659, %v1672
        %v1677 = vmul.f32 %v1660, %v1672
        %v1678 = vmul.f32 %v1661, %v1672
        %v1679 = vmul.f32 %v1662, %v1672
        %v1680 = vmul.f32 %v1663, %v1672
        %v1681 = vmul.f32 %v1664, %v1672
        %v1682 = vmul.f32 %v1665, %v1672
        %v1683 = vmul.f32 %v1666, %v1672
        %v1684 = vmul.f32 %v1667, %v1672
        %v1685 = vmul.f32 %v1668, %v1672
        %v1686 = vmul.f32 %v1669, %v1672
        %v1687 = vmul.f32 %v1670, %v1672
        %v1688 = vmul.f32 %v1671, %v1672
        %v1689 = vperm.slane %v1628, 0
        %v1690 = vadd.f32 %v1673, %v1689
        %v1691 = vadd.f32 %v1674, %v1689
        %v1692 = vadd.f32 %v1675, %v1689
        %v1693 = vadd.f32 %v1676, %v1689
        %v1694 = vadd.f32 %v1677, %v1689
        %v1695 = vadd.f32 %v1678, %v1689
        %v1696 = vadd.f32 %v1679, %v1689
        %v1697 = vadd.f32 %v1680, %v1689
        %v1698 = vadd.f32 %v1681, %v1689
        %v1699 = vadd.f32 %v1682, %v1689
        %v1700 = vadd.f32 %v1683, %v1689
        %v1701 = vadd.f32 %v1684, %v1689
        %v1702 = vadd.f32 %v1685, %v1689
        %v1703 = vadd.f32 %v1686, %v1689
        %v1704 = vadd.f32 %v1687, %v1689
        %v1705 = vadd.f32 %v1688, %v1689
        %v1706 = vmax.f32 %v1690, 0.0
        %v1707 = vmax.f32 %v1691, 0.0
        %v1708 = vmax.f32 %v1692, 0.0
        %v1709 = vmax.f32 %v1693, 0.0
        %v1710 = vmax.f32 %v1694, 0.0
        %v1711 = vmax.f32 %v1695, 0.0
        %v1712 = vmax.f32 %v1696, 0.0
        %v1713 = vmax.f32 %v1697, 0.0
        %v1714 = vmax.f32 %v1698, 0.0
        %v1715 = vmax.f32 %v1699, 0.0
        %v1716 = vmax.f32 %v1700, 0.0
        %v1717 = vmax.f32 %v1701, 0.0
        %v1718 = vmax.f32 %v1702, 0.0
        %v1719 = vmax.f32 %v1703, 0.0
        %v1720 = vmax.f32 %v1704, 0.0
        %v1721 = vmax.f32 %v1705, 0.0
        %v1722 = vpack.c.bf16 %v1707, %v1706
        %v1723 = vpack.c.bf16 %v1709, %v1708
        %v1724 = vpack.c.bf16 %v1711, %v1710
        %v1725 = vpack.c.bf16 %v1713, %v1712
        %v1726 = vpack.c.bf16 %v1715, %v1714
        %v1727 = vpack.c.bf16 %v1717, %v1716
        %v1728 = vpack.c.bf16 %v1719, %v1718
        %v1729 = vpack.c.bf16 %v1721, %v1720
        %v1746 = vunpack.c.l.b16 %v1630
        %v1747 = vunpack.c.l.b16 %v1631
        %v1748 = vunpack.c.l.b16 %v1632
        %v1749 = vunpack.c.l.b16 %v1633
        %v1750 = vunpack.c.l.b16 %v1634
        %v1751 = vunpack.c.l.b16 %v1635
        %v1752 = vunpack.c.l.b16 %v1636
        %v1753 = vunpack.c.l.b16 %v1637
        %v1754 = vunpack.c.l.b16 %v1638
        %v1755 = vunpack.c.l.b16 %v1639
        %v1756 = vunpack.c.l.b16 %v1640
        %v1757 = vunpack.c.l.b16 %v1641
        %v1758 = vunpack.c.l.b16 %v1642
        %v1759 = vunpack.c.l.b16 %v1643
        %v1760 = vunpack.c.l.b16 %v1644
        %v1761 = vunpack.c.l.b16 %v1645
        %v1762 = vpack.c.b16 %v1747, %v1746
        %v1763 = vpack.c.b16 %v1749, %v1748
        %v1764 = vpack.c.b16 %v1751, %v1750
        %v1765 = vpack.c.b16 %v1753, %v1752
        %v1766 = vpack.c.b16 %v1755, %v1754
        %v1767 = vpack.c.b16 %v1757, %v1756
        %v1768 = vpack.c.b16 %v1759, %v1758
        %v1769 = vpack.c.b16 %v1761, %v1760
        %1778 = vmatpush.bf16.msra.mxu0 %v1769
        %1779 = vmatpush.bf16.msra.mxu0 %v1768
        %1780 = vmatpush.bf16.msra.mxu0 %v1767
        %1781 = vmatpush.bf16.msra.mxu0 %v1766
        %1782 = vmatpush.bf16.msra.mxu0 %v1765
        %1783 = vmatpush.bf16.msra.mxu0 %v1764
        %1784 = vmatpush.bf16.msra.mxu0 %v1763
        %1785 = vmatpush.bf16.msra.mxu0 %v1762
        %1786 = vmatmul.bf16.gmra.mxu0 %v1722
        %v1787 = vpop.f32.mrf.mxu0
        %v1788 = vadd.f32 0.0, %v1787
        %v1789 = vpop.f32.mrf.mxu0
        %v1790 = vadd.f32 0.0, %v1789
        %1791 = vmatmul.bf16.gmra.mxu0 %v1723
        %v1792 = vpop.f32.mrf.mxu0
        %v1793 = vadd.f32 0.0, %v1792
        %v1794 = vpop.f32.mrf.mxu0
        %v1795 = vadd.f32 0.0, %v1794
        %1796 = vmatmul.bf16.gmra.mxu0 %v1724
        %v1797 = vpop.f32.mrf.mxu0
        %v1798 = vadd.f32 0.0, %v1797
        %v1799 = vpop.f32.mrf.mxu0
        %v1800 = vadd.f32 0.0, %v1799
        %1801 = vmatmul.bf16.gmra.mxu0 %v1725
        %v1802 = vpop.f32.mrf.mxu0
        %v1803 = vadd.f32 0.0, %v1802
        %v1804 = vpop.f32.mrf.mxu0
        %v1805 = vadd.f32 0.0, %v1804
        %1806 = vmatmul.bf16.gmra.mxu0 %v1726
        %v1807 = vpop.f32.mrf.mxu0
        %v1808 = vadd.f32 0.0, %v1807
        %v1809 = vpop.f32.mrf.mxu0
        %v1810 = vadd.f32 0.0, %v1809
        %1811 = vmatmul.bf16.gmra.mxu0 %v1727
        %v1812 = vpop.f32.mrf.mxu0
        %v1813 = vadd.f32 0.0, %v1812
        %v1814 = vpop.f32.mrf.mxu0
        %v1815 = vadd.f32 0.0, %v1814
        %1816 = vmatmul.bf16.gmra.mxu0 %v1728
        %v1817 = vpop.f32.mrf.mxu0
        %v1818 = vadd.f32 0.0, %v1817
        %v1819 = vpop.f32.mrf.mxu0
        %v1820 = vadd.f32 0.0, %v1819
        %1821 = vmatmul.bf16.gmra.mxu0 %v1729
        %v1822 = vpop.f32.mrf.mxu0
        %v1823 = vadd.f32 0.0, %v1822
        %v1824 = vpop.f32.mrf.mxu0
        %v1825 = vadd.f32 0.0, %v1824
        %1826 = vdwg.mxu0
        %1827 = vst [vmem:[%s1655] sm:$0xff] %v1788
        %1828 = vst [vmem:[%s1655 + $0x8] sm:$0xff] %v1790
        %1829 = vst [vmem:[%s1655 + $0x10] sm:$0xff] %v1793
        %1830 = vst [vmem:[%s1655 + $0x18] sm:$0xff] %v1795
        %1831 = vst [vmem:[%s1655 + $0x20] sm:$0xff] %v1798
        %1832 = vst [vmem:[%s1655 + $0x28] sm:$0xff] %v1800
        %1833 = vst [vmem:[%s1655 + $0x30] sm:$0xff] %v1803
        %1834 = vst [vmem:[%s1655 + $0x38] sm:$0xff] %v1805
        %1835 = vst [vmem:[%s1655 + $0x40] sm:$0xff] %v1808
        %1836 = vst [vmem:[%s1655 + $0x48] sm:$0xff] %v1810
        %1837 = vst [vmem:[%s1655 + $0x50] sm:$0xff] %v1813
        %1838 = vst [vmem:[%s1655 + $0x58] sm:$0xff] %v1815
        %1839 = vst [vmem:[%s1655 + $0x60] sm:$0xff] %v1818
        %1840 = vst [vmem:[%s1655 + $0x68] sm:$0xff] %v1820
        %1841 = vst [vmem:[%s1655 + $0x70] sm:$0xff] %v1823
        %1842 = vst [vmem:[%s1655 + $0x78] sm:$0xff] %v1825
        %v1843 = vadd.f32 %v1788, %v1790
        %v1844 = vadd.f32 %v1843, %v1793
        %v1845 = vadd.f32 %v1844, %v1795
        %v1846 = vadd.f32 %v1845, %v1798
        %v1847 = vadd.f32 %v1846, %v1800
        %v1848 = vadd.f32 %v1847, %v1803
        %v1849 = vadd.f32 %v1848, %v1805
        %v1850 = vadd.f32 %v1849, %v1808
        %v1851 = vadd.f32 %v1850, %v1810
        %v1852 = vadd.f32 %v1851, %v1813
        %v1853 = vadd.f32 %v1852, %v1815
        %v1854 = vadd.f32 %v1853, %v1818
        %v1855 = vadd.f32 %v1854, %v1820
        %v1856 = vadd.f32 %v1855, %v1823
        %v1857 = vadd.f32 %v1856, %v1825
        %v1858 = vrot.slane %v1857, 4
        %v1859 = vadd.f32 %v1857, %v1858
        %v1860 = vrot.slane %v1859, 2
        %v1861 = vadd.f32 %v1859, %v1860
        %v1862 = vrot.slane %v1861, 1
        %v1863 = vadd.f32 %v1861, %v1862
        %v1864 = vadd.f32 %v1652, %v1863
        %v1865 = vmul.f32 %v1788, %v1788
        %v1866 = vmul.f32 %v1790, %v1790
        %v1867 = vmul.f32 %v1793, %v1793
        %v1868 = vmul.f32 %v1795, %v1795
        %v1869 = vmul.f32 %v1798, %v1798
        %v1870 = vmul.f32 %v1800, %v1800
        %v1871 = vmul.f32 %v1803, %v1803
        %v1872 = vmul.f32 %v1805, %v1805
        %v1873 = vmul.f32 %v1808, %v1808
        %v1874 = vmul.f32 %v1810, %v1810
        %v1875 = vmul.f32 %v1813, %v1813
        %v1876 = vmul.f32 %v1815, %v1815
        %v1877 = vmul.f32 %v1818, %v1818
        %v1878 = vmul.f32 %v1820, %v1820
        %v1879 = vmul.f32 %v1823, %v1823
        %v1880 = vmul.f32 %v1825, %v1825
        %v1881 = vadd.f32 %v1865, %v1866
        %v1882 = vadd.f32 %v1881, %v1867
        %v1883 = vadd.f32 %v1882, %v1868
        %v1884 = vadd.f32 %v1883, %v1869
        %v1885 = vadd.f32 %v1884, %v1870
        %v1886 = vadd.f32 %v1885, %v1871
        %v1887 = vadd.f32 %v1886, %v1872
        %v1888 = vadd.f32 %v1887, %v1873
        %v1889 = vadd.f32 %v1888, %v1874
        %v1890 = vadd.f32 %v1889, %v1875
        %v1891 = vadd.f32 %v1890, %v1876
        %v1892 = vadd.f32 %v1891, %v1877
        %v1893 = vadd.f32 %v1892, %v1878
        %v1894 = vadd.f32 %v1893, %v1879
        %v1895 = vadd.f32 %v1894, %v1880
        %v1896 = vrot.slane %v1895, 4
        %v1897 = vadd.f32 %v1895, %v1896
        %v1898 = vrot.slane %v1897, 2
        %v1899 = vadd.f32 %v1897, %v1898
        %v1900 = vrot.slane %v1899, 1
        %v1901 = vadd.f32 %v1899, %v1900
        %v1902 = vadd.f32 %v1653, %v1901
      $region66: #{encoder_subtrack_d_forward.1} parent=39 // loop_footer
        %s1651 = sadd.s32 1, %s1647
      $region67: #{encoder_subtrack_d_forward.1} parent=39 // loop_footer_branch
        %1646 = sbr.rel target = $region63
      $region68: #{encoder_subtrack_d_forward.1} parent=39 // loop_exit
        _
      %v1903 = vld [vmem:[#allocation2 + $0x180] sm:$0xff]
      %v1904 = vld [vmem:[#allocation2 + $0x188] sm:$0xff]
      %v1905 = vld [vmem:[#allocation2 + $0x190] sm:$0xff]
      %v1906 = vld [vmem:[#allocation2 + $0x198] sm:$0xff]
      %v1907 = vld [vmem:[#allocation2 + $0x1a0] sm:$0xff]
      %v1908 = vld [vmem:[#allocation2 + $0x1a8] sm:$0xff]
      %v1909 = vld [vmem:[#allocation2 + $0x1b0] sm:$0xff]
      %v1910 = vld [vmem:[#allocation2 + $0x1b8] sm:$0xff]
      %v1911 = vld [vmem:[#allocation2 + $0x1c0] sm:$0xff]
      %v1912 = vld [vmem:[#allocation2 + $0x1c8] sm:$0xff]
      %v1913 = vld [vmem:[#allocation2 + $0x1d0] sm:$0xff]
      %v1914 = vld [vmem:[#allocation2 + $0x1d8] sm:$0xff]
      %v1915 = vld [vmem:[#allocation2 + $0x1e0] sm:$0xff]
      %v1916 = vld [vmem:[#allocation2 + $0x1e8] sm:$0xff]
      %v1917 = vld [vmem:[#allocation2 + $0x1f0] sm:$0xff]
      %v1918 = vld [vmem:[#allocation2 + $0x1f8] sm:$0xff]
      %v1919 = vperm.slane %v1626, 0
      %v1920 = vmul.f32 %v1903, %v1919
      %v1921 = vmul.f32 %v1904, %v1919
      %v1922 = vmul.f32 %v1905, %v1919
      %v1923 = vmul.f32 %v1906, %v1919
      %v1924 = vmul.f32 %v1907, %v1919
      %v1925 = vmul.f32 %v1908, %v1919
      %v1926 = vmul.f32 %v1909, %v1919
      %v1927 = vmul.f32 %v1910, %v1919
      %v1928 = vmul.f32 %v1911, %v1919
      %v1929 = vmul.f32 %v1912, %v1919
      %v1930 = vmul.f32 %v1913, %v1919
      %v1931 = vmul.f32 %v1914, %v1919
      %v1932 = vmul.f32 %v1915, %v1919
      %v1933 = vmul.f32 %v1916, %v1919
      %v1934 = vmul.f32 %v1917, %v1919
      %v1935 = vmul.f32 %v1918, %v1919
      %v1936 = vperm.slane %v1628, 0
      %v1937 = vadd.f32 %v1920, %v1936
      %v1938 = vadd.f32 %v1921, %v1936
      %v1939 = vadd.f32 %v1922, %v1936
      %v1940 = vadd.f32 %v1923, %v1936
      %v1941 = vadd.f32 %v1924, %v1936
      %v1942 = vadd.f32 %v1925, %v1936
      %v1943 = vadd.f32 %v1926, %v1936
      %v1944 = vadd.f32 %v1927, %v1936
      %v1945 = vadd.f32 %v1928, %v1936
      %v1946 = vadd.f32 %v1929, %v1936
      %v1947 = vadd.f32 %v1930, %v1936
      %v1948 = vadd.f32 %v1931, %v1936
      %v1949 = vadd.f32 %v1932, %v1936
      %v1950 = vadd.f32 %v1933, %v1936
      %v1951 = vadd.f32 %v1934, %v1936
      %v1952 = vadd.f32 %v1935, %v1936
      %v1953 = vmax.f32 %v1937, 0.0
      %v1954 = vmax.f32 %v1938, 0.0
      %v1955 = vmax.f32 %v1939, 0.0
      %v1956 = vmax.f32 %v1940, 0.0
      %v1957 = vmax.f32 %v1941, 0.0
      %v1958 = vmax.f32 %v1942, 0.0
      %v1959 = vmax.f32 %v1943, 0.0
      %v1960 = vmax.f32 %v1944, 0.0
      %v1961 = vmax.f32 %v1945, 0.0
      %v1962 = vmax.f32 %v1946, 0.0
      %v1963 = vmax.f32 %v1947, 0.0
      %v1964 = vmax.f32 %v1948, 0.0
      %v1965 = vmax.f32 %v1949, 0.0
      %v1966 = vmax.f32 %v1950, 0.0
      %v1967 = vmax.f32 %v1951, 0.0
      %v1968 = vmax.f32 %v1952, 0.0
      %v1969 = vmul.f32 %v1953, %v274
      %v1970 = vmul.f32 %v1954, %v275
      %v1971 = vmul.f32 %v1955, %v276
      %v1972 = vmul.f32 %v1956, %v277
      %v1973 = vmul.f32 %v1957, %v278
      %v1974 = vmul.f32 %v1958, %v279
      %v1975 = vmul.f32 %v1959, %v280
      %v1976 = vmul.f32 %v1960, %v281
      %v1977 = vmul.f32 %v1961, %v282
      %v1978 = vmul.f32 %v1962, %v283
      %v1979 = vmul.f32 %v1963, %v284
      %v1980 = vmul.f32 %v1964, %v285
      %v1981 = vmul.f32 %v1965, %v286
      %v1982 = vmul.f32 %v1966, %v287
      %v1983 = vmul.f32 %v1967, %v288
      %v1984 = vmul.f32 %v1968, %v289
      %v1985 = vpack.c.bf16 %v1970, %v1969
      %v1986 = vpack.c.bf16 %v1972, %v1971
      %v1987 = vpack.c.bf16 %v1974, %v1973
      %v1988 = vpack.c.bf16 %v1976, %v1975
      %v1989 = vpack.c.bf16 %v1978, %v1977
      %v1990 = vpack.c.bf16 %v1980, %v1979
      %v1991 = vpack.c.bf16 %v1982, %v1981
      %v1992 = vpack.c.bf16 %v1984, %v1983
      %v2009 = vunpack.c.l.b16 %v1630
      %v2010 = vunpack.c.l.b16 %v1631
      %v2011 = vunpack.c.l.b16 %v1632
      %v2012 = vunpack.c.l.b16 %v1633
      %v2013 = vunpack.c.l.b16 %v1634
      %v2014 = vunpack.c.l.b16 %v1635
      %v2015 = vunpack.c.l.b16 %v1636
      %v2016 = vunpack.c.l.b16 %v1637
      %v2017 = vunpack.c.l.b16 %v1638
      %v2018 = vunpack.c.l.b16 %v1639
      %v2019 = vunpack.c.l.b16 %v1640
      %v2020 = vunpack.c.l.b16 %v1641
      %v2021 = vunpack.c.l.b16 %v1642
      %v2022 = vunpack.c.l.b16 %v1643
      %v2023 = vunpack.c.l.b16 %v1644
      %v2024 = vunpack.c.l.b16 %v1645
      %v2025 = vpack.c.b16 %v2010, %v2009
      %v2026 = vpack.c.b16 %v2012, %v2011
      %v2027 = vpack.c.b16 %v2014, %v2013
      %v2028 = vpack.c.b16 %v2016, %v2015
      %v2029 = vpack.c.b16 %v2018, %v2017
      %v2030 = vpack.c.b16 %v2020, %v2019
      %v2031 = vpack.c.b16 %v2022, %v2021
      %v2032 = vpack.c.b16 %v2024, %v2023
      %2041 = vmatpush.bf16.msra.mxu0 %v2032
      %2042 = vmatpush.bf16.msra.mxu0 %v2031
      %2043 = vmatpush.bf16.msra.mxu0 %v2030
      %2044 = vmatpush.bf16.msra.mxu0 %v2029
      %2045 = vmatpush.bf16.msra.mxu0 %v2028
      %2046 = vmatpush.bf16.msra.mxu0 %v2027
      %2047 = vmatpush.bf16.msra.mxu0 %v2026
      %2048 = vmatpush.bf16.msra.mxu0 %v2025
      %2049 = vmatmul.bf16.gmra.mxu0 %v1985
      %v2050 = vpop.f32.mrf.mxu0
      %v2051 = vadd.f32 0.0, %v2050
      %v2052 = vpop.f32.mrf.mxu0
      %v2053 = vadd.f32 0.0, %v2052
      %2054 = vmatmul.bf16.gmra.mxu0 %v1986
      %v2055 = vpop.f32.mrf.mxu0
      %v2056 = vadd.f32 0.0, %v2055
      %v2057 = vpop.f32.mrf.mxu0
      %v2058 = vadd.f32 0.0, %v2057
      %2059 = vmatmul.bf16.gmra.mxu0 %v1987
      %v2060 = vpop.f32.mrf.mxu0
      %v2061 = vadd.f32 0.0, %v2060
      %v2062 = vpop.f32.mrf.mxu0
      %v2063 = vadd.f32 0.0, %v2062
      %2064 = vmatmul.bf16.gmra.mxu0 %v1988
      %v2065 = vpop.f32.mrf.mxu0
      %v2066 = vadd.f32 0.0, %v2065
      %v2067 = vpop.f32.mrf.mxu0
      %v2068 = vadd.f32 0.0, %v2067
      %2069 = vmatmul.bf16.gmra.mxu0 %v1989
      %v2070 = vpop.f32.mrf.mxu0
      %v2071 = vadd.f32 0.0, %v2070
      %v2072 = vpop.f32.mrf.mxu0
      %v2073 = vadd.f32 0.0, %v2072
      %2074 = vmatmul.bf16.gmra.mxu0 %v1990
      %v2075 = vpop.f32.mrf.mxu0
      %v2076 = vadd.f32 0.0, %v2075
      %v2077 = vpop.f32.mrf.mxu0
      %v2078 = vadd.f32 0.0, %v2077
      %2079 = vmatmul.bf16.gmra.mxu0 %v1991
      %v2080 = vpop.f32.mrf.mxu0
      %v2081 = vadd.f32 0.0, %v2080
      %v2082 = vpop.f32.mrf.mxu0
      %v2083 = vadd.f32 0.0, %v2082
      %2084 = vmatmul.bf16.gmra.mxu0 %v1992
      %v2085 = vpop.f32.mrf.mxu0
      %v2086 = vadd.f32 0.0, %v2085
      %v2087 = vpop.f32.mrf.mxu0
      %v2088 = vadd.f32 0.0, %v2087
      %2089 = vdwg.mxu0
      %2090 = vst [vmem:[#allocation2 + $0x180] sm:$0xff] %v2051
      %2091 = vst [vmem:[#allocation2 + $0x188] sm:$0xff] %v2053
      %2092 = vst [vmem:[#allocation2 + $0x190] sm:$0xff] %v2056
      %2093 = vst [vmem:[#allocation2 + $0x198] sm:$0xff] %v2058
      %2094 = vst [vmem:[#allocation2 + $0x1a0] sm:$0xff] %v2061
      %2095 = vst [vmem:[#allocation2 + $0x1a8] sm:$0xff] %v2063
      %2096 = vst [vmem:[#allocation2 + $0x1b0] sm:$0xff] %v2066
      %2097 = vst [vmem:[#allocation2 + $0x1b8] sm:$0xff] %v2068
      %2098 = vst [vmem:[#allocation2 + $0x1c0] sm:$0xff] %v2071
      %2099 = vst [vmem:[#allocation2 + $0x1c8] sm:$0xff] %v2073
      %2100 = vst [vmem:[#allocation2 + $0x1d0] sm:$0xff] %v2076
      %2101 = vst [vmem:[#allocation2 + $0x1d8] sm:$0xff] %v2078
      %2102 = vst [vmem:[#allocation2 + $0x1e0] sm:$0xff] %v2081
      %2103 = vst [vmem:[#allocation2 + $0x1e8] sm:$0xff] %v2083
      %2104 = vst [vmem:[#allocation2 + $0x1f0] sm:$0xff] %v2086
      %2105 = vst [vmem:[#allocation2 + $0x1f8] sm:$0xff] %v2088
      %v2106 = vadd.f32 %v2051, %v2053
      %v2107 = vadd.f32 %v2106, %v2056
      %v2108 = vadd.f32 %v2107, %v2058
      %v2109 = vadd.f32 %v2108, %v2061
      %v2110 = vadd.f32 %v2109, %v2063
      %v2111 = vadd.f32 %v2110, %v2066
      %v2112 = vadd.f32 %v2111, %v2068
      %v2113 = vadd.f32 %v2112, %v2071
      %v2114 = vadd.f32 %v2113, %v2073
      %v2115 = vadd.f32 %v2114, %v2076
      %v2116 = vadd.f32 %v2115, %v2078
      %v2117 = vadd.f32 %v2116, %v2081
      %v2118 = vadd.f32 %v2117, %v2083
      %v2119 = vadd.f32 %v2118, %v2086
      %v2120 = vadd.f32 %v2119, %v2088
      %v2121 = vrot.slane %v2120, 4
      %v2122 = vadd.f32 %v2120, %v2121
      %v2123 = vrot.slane %v2122, 2
      %v2124 = vadd.f32 %v2122, %v2123
      %v2125 = vrot.slane %v2124, 1
      %v2126 = vadd.f32 %v2124, %v2125
      %v2127 = vadd.f32 %v1652, %v2126
      %v2128 = vmul.f32 %v2051, %v2051
      %v2129 = vmul.f32 %v2053, %v2053
      %v2130 = vmul.f32 %v2056, %v2056
      %v2131 = vmul.f32 %v2058, %v2058
      %v2132 = vmul.f32 %v2061, %v2061
      %v2133 = vmul.f32 %v2063, %v2063
      %v2134 = vmul.f32 %v2066, %v2066
      %v2135 = vmul.f32 %v2068, %v2068
      %v2136 = vmul.f32 %v2071, %v2071
      %v2137 = vmul.f32 %v2073, %v2073
      %v2138 = vmul.f32 %v2076, %v2076
      %v2139 = vmul.f32 %v2078, %v2078
      %v2140 = vmul.f32 %v2081, %v2081
      %v2141 = vmul.f32 %v2083, %v2083
      %v2142 = vmul.f32 %v2086, %v2086
      %v2143 = vmul.f32 %v2088, %v2088
      %v2144 = vadd.f32 %v2128, %v2129
      %v2145 = vadd.f32 %v2144, %v2130
      %v2146 = vadd.f32 %v2145, %v2131
      %v2147 = vadd.f32 %v2146, %v2132
      %v2148 = vadd.f32 %v2147, %v2133
      %v2149 = vadd.f32 %v2148, %v2134
      %v2150 = vadd.f32 %v2149, %v2135
      %v2151 = vadd.f32 %v2150, %v2136
      %v2152 = vadd.f32 %v2151, %v2137
      %v2153 = vadd.f32 %v2152, %v2138
      %v2154 = vadd.f32 %v2153, %v2139
      %v2155 = vadd.f32 %v2154, %v2140
      %v2156 = vadd.f32 %v2155, %v2141
      %v2157 = vadd.f32 %v2156, %v2142
      %v2158 = vadd.f32 %v2157, %v2143
      %v2159 = vrot.slane %v2158, 4
      %v2160 = vadd.f32 %v2158, %v2159
      %v2161 = vrot.slane %v2160, 2
      %v2162 = vadd.f32 %v2160, %v2161
      %v2163 = vrot.slane %v2162, 1
      %v2164 = vadd.f32 %v2162, %v2163
      %v2165 = vadd.f32 %v1653, %v2164
      %v2166 = vld [vmem:[%s3 + $0x3] sm:$0x1]
      %v2167 = vld [vmem:[%s4 + $0x3] sm:$0x1]
      %v2168 = vmul.f32 %v2127, 0.0020833334
      %v2169 = vmul.f32 %v2165, 0.0020833334
      %v2170 = vmul.f32 %v2168, %v2168
      %v2171 = vsub.f32 %v2169, %v2170
      %v2172 = vmax.f32 %v2171, 0.0
      %v2173 = vadd.f32 %v2172, 1e-05
      %v2174 = vrsqrt.pop %v2173
      %v2175 = vmul.f32 %v2174, %v2173
      %v2176 = vmul.f32 %v2175, %v2174
      %v2177 = vmul.f32 0.5, %v2176
      %v2178 = vsub.f32 1.5, %v2177
      %v2179 = vmul.f32 %v2174, %v2178
      %vm2180 = vweird.f32 %v2173
      %vm2181 = vweird.f32 %v2174
      %vm2182 = vmor %vm2180, %vm2181
      %v2183 = vsel %vm2182, %v2174, %v2179
      %v2184 = vmul.f32 %v2166, %v2183
      %v2185 = vmul.f32 %v2168, %v2184
      %v2186 = vsub.f32 %v2167, %v2185
      loop: start=0, step=1, limit=4
      $region69: #{encoder_subtrack_d_forward.1} parent=39 // loop_pre_header
        _
      $region70: #{encoder_subtrack_d_forward.1} parent=39 // loop_header
        %s2188 = sphi 0, %s2192
        %p2189 = scmp.ge.s32.totalorder %s2188, 4
      $region71: #{encoder_subtrack_d_forward.1} parent=39 // loop_header_branch
        %2191 = sbr.rel (%p2189) target = $region75
      $region72: #{encoder_subtrack_d_forward.1} parent=39 // loop_body
        %s2193 = smul.u32 %s2188, 128
        %s2194 = scalar_lea.vmem [#allocation2], %s2193
        %v2195 = vld [vmem:[%s2194] sm:$0xff]
        %v2196 = vld [vmem:[%s2194 + $0x8] sm:$0xff]
        %v2197 = vld [vmem:[%s2194 + $0x10] sm:$0xff]
        %v2198 = vld [vmem:[%s2194 + $0x18] sm:$0xff]
        %v2199 = vld [vmem:[%s2194 + $0x20] sm:$0xff]
        %v2200 = vld [vmem:[%s2194 + $0x28] sm:$0xff]
        %v2201 = vld [vmem:[%s2194 + $0x30] sm:$0xff]
        %v2202 = vld [vmem:[%s2194 + $0x38] sm:$0xff]
        %v2203 = vld [vmem:[%s2194 + $0x40] sm:$0xff]
        %v2204 = vld [vmem:[%s2194 + $0x48] sm:$0xff]
        %v2205 = vld [vmem:[%s2194 + $0x50] sm:$0xff]
        %v2206 = vld [vmem:[%s2194 + $0x58] sm:$0xff]
        %v2207 = vld [vmem:[%s2194 + $0x60] sm:$0xff]
        %v2208 = vld [vmem:[%s2194 + $0x68] sm:$0xff]
        %v2209 = vld [vmem:[%s2194 + $0x70] sm:$0xff]
        %v2210 = vld [vmem:[%s2194 + $0x78] sm:$0xff]
        %v2211 = vperm.slane %v2184, 0
        %v2212 = vmul.f32 %v2195, %v2211
        %v2213 = vmul.f32 %v2196, %v2211
        %v2214 = vmul.f32 %v2197, %v2211
        %v2215 = vmul.f32 %v2198, %v2211
        %v2216 = vmul.f32 %v2199, %v2211
        %v2217 = vmul.f32 %v2200, %v2211
        %v2218 = vmul.f32 %v2201, %v2211
        %v2219 = vmul.f32 %v2202, %v2211
        %v2220 = vmul.f32 %v2203, %v2211
        %v2221 = vmul.f32 %v2204, %v2211
        %v2222 = vmul.f32 %v2205, %v2211
        %v2223 = vmul.f32 %v2206, %v2211
        %v2224 = vmul.f32 %v2207, %v2211
        %v2225 = vmul.f32 %v2208, %v2211
        %v2226 = vmul.f32 %v2209, %v2211
        %v2227 = vmul.f32 %v2210, %v2211
        %v2228 = vperm.slane %v2186, 0
        %v2229 = vadd.f32 %v2212, %v2228
        %v2230 = vadd.f32 %v2213, %v2228
        %v2231 = vadd.f32 %v2214, %v2228
        %v2232 = vadd.f32 %v2215, %v2228
        %v2233 = vadd.f32 %v2216, %v2228
        %v2234 = vadd.f32 %v2217, %v2228
        %v2235 = vadd.f32 %v2218, %v2228
        %v2236 = vadd.f32 %v2219, %v2228
        %v2237 = vadd.f32 %v2220, %v2228
        %v2238 = vadd.f32 %v2221, %v2228
        %v2239 = vadd.f32 %v2222, %v2228
        %v2240 = vadd.f32 %v2223, %v2228
        %v2241 = vadd.f32 %v2224, %v2228
        %v2242 = vadd.f32 %v2225, %v2228
        %v2243 = vadd.f32 %v2226, %v2228
        %v2244 = vadd.f32 %v2227, %v2228
        %v2245 = vmax.f32 %v2229, 0.0
        %v2246 = vmax.f32 %v2230, 0.0
        %v2247 = vmax.f32 %v2231, 0.0
        %v2248 = vmax.f32 %v2232, 0.0
        %v2249 = vmax.f32 %v2233, 0.0
        %v2250 = vmax.f32 %v2234, 0.0
        %v2251 = vmax.f32 %v2235, 0.0
        %v2252 = vmax.f32 %v2236, 0.0
        %v2253 = vmax.f32 %v2237, 0.0
        %v2254 = vmax.f32 %v2238, 0.0
        %v2255 = vmax.f32 %v2239, 0.0
        %v2256 = vmax.f32 %v2240, 0.0
        %v2257 = vmax.f32 %v2241, 0.0
        %v2258 = vmax.f32 %v2242, 0.0
        %v2259 = vmax.f32 %v2243, 0.0
        %v2260 = vmax.f32 %v2244, 0.0
        %s2261 = scalar_lea.vmem %s224, %s2193
        %vm2262 = vcmask 261120
        %2263 = vst.msk [vmem:[%s2261] sm:$0xff] %vm2262, %v2245
        %2264 = vst.msk [vmem:[%s2261 + $0x8] sm:$0xff] %vm2262, %v2246
        %2265 = vst.msk [vmem:[%s2261 + $0x10] sm:$0xff] %vm2262, %v2247
        %2266 = vst.msk [vmem:[%s2261 + $0x18] sm:$0xff] %vm2262, %v2248
        %2267 = vst.msk [vmem:[%s2261 + $0x20] sm:$0xff] %vm2262, %v2249
        %2268 = vst.msk [vmem:[%s2261 + $0x28] sm:$0xff] %vm2262, %v2250
        %2269 = vst.msk [vmem:[%s2261 + $0x30] sm:$0xff] %vm2262, %v2251
        %2270 = vst.msk [vmem:[%s2261 + $0x38] sm:$0xff] %vm2262, %v2252
        %2271 = vst.msk [vmem:[%s2261 + $0x40] sm:$0xff] %vm2262, %v2253
        %2272 = vst.msk [vmem:[%s2261 + $0x48] sm:$0xff] %vm2262, %v2254
        %2273 = vst.msk [vmem:[%s2261 + $0x50] sm:$0xff] %vm2262, %v2255
        %2274 = vst.msk [vmem:[%s2261 + $0x58] sm:$0xff] %vm2262, %v2256
        %2275 = vst.msk [vmem:[%s2261 + $0x60] sm:$0xff] %vm2262, %v2257
        %2276 = vst.msk [vmem:[%s2261 + $0x68] sm:$0xff] %vm2262, %v2258
        %2277 = vst.msk [vmem:[%s2261 + $0x70] sm:$0xff] %vm2262, %v2259
        %2278 = vst.msk [vmem:[%s2261 + $0x78] sm:$0xff] %vm2262, %v2260
      $region73: #{encoder_subtrack_d_forward.1} parent=39 // loop_footer
        %s2192 = sadd.s32 1, %s2188
      $region74: #{encoder_subtrack_d_forward.1} parent=39 // loop_footer_branch
        %2187 = sbr.rel target = $region70
      $region75: #{encoder_subtrack_d_forward.1} parent=39 // loop_exit
        _
      %p2279 = scmp.lt.s32.totalorder %s16, 1
      %s2280 = scalar_select %p2279, %s16, 1
      %s2281 = smul.addr %s2280, 64
      %s2282 = smul.addr %s2281, 8
      %s2283 = scalar_lea.vmem %s5, %s2282
      // Predicated region
      $region76: #{encoder_subtrack_d_forward.1} parent=39 // pred_check
        %p2284 = pneg %p144
      $region77: #{encoder_subtrack_d_forward.1} parent=39 // pred_check_branch
        %2286 = sbr.rel (%p2284) target = $region79
      $region78: #{encoder_subtrack_d_forward.1} parent=39 // pred_region
        _
      $region79: #{encoder_subtrack_d_forward.1} parent=39 // pred_fallthru
        _
    $region40: #{encoder_subtrack_d_forward.1} parent=5 // pred_fallthru
      _
    %p2287 = scmp.le.s32.totalorder 2, %s11
    // Predicated region
    $region80: #{encoder_subtrack_d_forward.1} parent=5 // pred_check
      %p2288 = pneg %p2287
    $region81: #{encoder_subtrack_d_forward.1} parent=5 // pred_check_branch
      %2290 = sbr.rel (%p2288) target = $region83
    $region82: #{encoder_subtrack_d_forward.1} parent=5 // pred_region
      %s2291 = ssub.s32 %s11, 2
      // Predicated region
      $region84: #{encoder_subtrack_d_forward.1} parent=82 // pred_check
        %p2292 = pneg %p150
      $region85: #{encoder_subtrack_d_forward.1} parent=82 // pred_check_branch
        %2294 = sbr.rel (%p2292) target = $region87
      $region86: #{encoder_subtrack_d_forward.1} parent=82 // pred_region
        %p2295 = scmp.lt.s32.totalorder %s17, 1
        %s2296 = scalar_select %p2295, %s17, 1
        %s2297 = smul.addr %s2296, 64
        %s2298 = smul.addr %s2297, 8
        %s2299 = scalar_lea.vmem %s5, %s2298
      $region87: #{encoder_subtrack_d_forward.1} parent=82 // pred_fallthru
        _
    $region83: #{encoder_subtrack_d_forward.1} parent=5 // pred_fallthru
      _
  $region6: #{encoder_subtrack_d_forward.1} parent=0 // loop_footer
    %s15 = sadd.s32 1, %s11
  $region7: #{encoder_subtrack_d_forward.1} parent=0 // loop_footer_branch
    %10 = sbr.rel target = $region3
  $region8: #{encoder_subtrack_d_forward.1} parent=0 // loop_exit
    _

</llo_original>
